<compile_context>
chip_gen: v7x
topology: tpu7x:2x2x1
jax: 0.10.0
libtpu: 0.0.40
codegen_flags: <defaults>
</compile_context>

<pallas_src>
import jax
import jax.numpy as jnp
from jax import lax
from jax.experimental import pallas as pl
from jax.experimental.pallas import tpu as pltpu


def _pick_vmem_limit_bytes():
    """~3/4 of physical VMEM (96 MiB on v5e/v6e, 48 MiB on v7x)."""
    cap = None
    try:
        info = pltpu.get_tpu_info()
        cap = getattr(info, "vmem_capacity_bytes", None)
    except Exception:
        cap = None
    if not cap:
        cap = 64 * 1024 * 1024  # conservative (v7x-sized) fallback
    return int(min(cap * 3 // 4, 100 * 1024 * 1024))


def _make_kernel(*, K, S, P, H, W, Ho, Wo, Cin, packed, compute_dtype):
    """Builds the Pallas kernel for one (batch, cout-tile) grid step."""
    KKC = K * K * Cin

    def kernel(x_ref, w_ref, shift_ref, o_ref, *scratch):
        # x_ref:     (1, H, W, Cin)    NHWC input block (one image)
        # w_ref:     (K*K*Cin, TCo)    tap-packed conv taps, BN scale folded in
        # shift_ref: (1, TCo)          folded BN shift
        # o_ref:     (1, Ho*Wo, TCo)   flattened-spatial output block
        # scratch (packed path only):
        #   xp_ref:  (H+2P, W+2P, Cin) padded input, built once per image
        #   col_ref: (Ho, Wo, K*K*Cin) tap-packed im2col, built once per image
        if packed:
            xp_ref, col_ref = scratch

            @pl.when(pl.program_id(1) == 0)       # once per image, not per tile
            def _build_packed():
                if P > 0:
                    # Zero only the halo ring, not the whole buffer.
                    zrow = jnp.zeros((P, W + 2 * P, Cin), compute_dtype)
                    xp_ref[0:P, :, :] = zrow
                    xp_ref[P + H:, :, :] = zrow
                    zcol = jnp.zeros((H, P, Cin), compute_dtype)
                    xp_ref[P:P + H, 0:P, :] = zcol
                    xp_ref[P:P + H, P + W:, :] = zcol
                xp_ref[P:P + H, P:P + W, :] = x_ref[0]

                # Pack the K*K shifted windows along the channel (lane) axis so
                # the channel-mixing is a single deep-contraction MXU matmul.
                for kh in range(K):
                    for kw in range(K):
                        if S == 1:
                            t = xp_ref[kh:kh + Ho, kw:kw + Wo, :]
                        else:
                            # TODO(synk): deinterleave W into S phases once
                            # instead of K*K sublane-strided reads.
                            t = xp_ref[pl.ds(kh, Ho, S), pl.ds(kw, Wo, S), :]
                        off = (kh * K + kw) * Cin
                        col_ref[:, :, off:off + Cin] = t

            col = col_ref[...]                    # (Ho, Wo, K*K*Cin)
        else:
            col = x_ref[0]                        # 1x1/s1/p0: already "packed"

        # Single reshape (layout-preserving when Wo % 8 == 0), single matmul.
        lhs = col.reshape(Ho * Wo, KKC)
        acc = jnp.dot(lhs, w_ref[...], preferred_element_type=jnp.float32)
        out = acc + shift_ref[...]                # (Ho*Wo, TCo)
        o_ref[0] = jnp.maximum(out, 0.0).astype(o_ref.dtype)

    return kernel


def conv_layer(x_nchw, weight, gamma, beta, running_mean, running_var, *,
               stride=1, padding=0, eps=1e-5, compute_dtype=jnp.float32):
    """ConvLayer forward: conv (no bias, groups=1) + eval-mode BN + ReLU.

    x_nchw: (N, Cin, H, W) f32, weight: (Cout, Cin, K, K) (PyTorch layout).
    Returns (N, Cout, Ho, Wo) f32.
    """
    N, Cin, H, W = x_nchw.shape
    Cout, cin_w, K, k2 = weight.shape
    assert cin_w == Cin and K == k2, "groups=1 convolution expected"
    S, P = int(stride), int(padding)
    Ho = (H + 2 * P - K) // S + 1
    Wo = (W + 2 * P - K) // S + 1

    # ---- one-time parameter folding + layout (plain JAX, tiny) ----
    scale = gamma / jnp.sqrt(running_var + eps)                        # (Cout,)
    shift = (beta - running_mean * scale).reshape(1, Cout).astype(jnp.float32)
    w_f = weight.astype(jnp.float32) * scale[:, None, None, None]      # BN fold
    # (Cout, Cin, K, K) -> (K, K, Cin, Cout) -> (K*K*Cin, Cout): tap-packed so
    # the kernel does ONE matmul with contraction depth K*K*Cin.
    w_r = jnp.transpose(w_f, (2, 3, 1, 0)).reshape(K * K * Cin, Cout)
    w_r = w_r.astype(compute_dtype)

    # NCHW -> NHWC so channels sit on the lane/contraction axis.
    # TODO(synk): keep activations NHWC (and bf16) across consecutive layers
    # instead of converting per call.
    x = jnp.transpose(x_nchw, (0, 2, 3, 1)).astype(compute_dtype)

    # Cout tiling: prefer 256 (v6e/v7x MXU N-width), then 128, else full Cout.
    if Cout % 256 == 0:
        tco = 256
    elif Cout % 128 == 0:
        tco = 128
    else:
        tco = Cout
    n_co = Cout // tco

    packed = not (K == 1 and P == 0 and S == 1)
    scratch = ([pltpu.VMEM((H + 2 * P, W + 2 * P, Cin), compute_dtype),
                pltpu.VMEM((Ho, Wo, K * K * Cin), compute_dtype)]
               if packed else [])

    kernel = _make_kernel(K=K, S=S, P=P, H=H, W=W, Ho=Ho, Wo=Wo, Cin=Cin,
                          packed=packed, compute_dtype=compute_dtype)

    out_flat = pl.pallas_call(
        kernel,
        out_shape=jax.ShapeDtypeStruct((N, Ho * Wo, Cout), jnp.float32),
        grid=(N, n_co),
        in_specs=[
            pl.BlockSpec((1, H, W, Cin), lambda n, c: (n, 0, 0, 0)),
            pl.BlockSpec((K * K * Cin, tco), lambda n, c: (0, c)),
            pl.BlockSpec((1, tco), lambda n, c: (0, c)),
        ],
        out_specs=pl.BlockSpec((1, Ho * Wo, tco), lambda n, c: (n, 0, c)),
        scratch_shapes=scratch,
        compiler_params=pltpu.CompilerParams(
            # Batch axis feeds both TensorCores; the Cout-tile axis stays
            # sequential ("arbitrary") so the once-per-image scratch build
            # guarded on program_id(1) == 0 is valid.
            dimension_semantics=("parallel", "arbitrary"),
            vmem_limit_bytes=_pick_vmem_limit_bytes(),
        ),
    )(x, w_r, shift)

    # (N, Ho*Wo, Cout) -> (N, Ho, Wo, Cout) is a layout-preserving reshape;
    # final transpose back to the PyTorch NCHW contract.
    out = out_flat.reshape(N, Ho, Wo, Cout)
    return jnp.transpose(out, (0, 3, 1, 2))


def _reference(x, w, gamma, beta, rm, rv, *, stride, padding, eps=1e-5):
    """Pure-JAX reference matching the PyTorch module (eval-mode BN)."""
    y = lax.conv_general_dilated(
        x, w, (stride, stride), ((padding, padding), (padding, padding)),
        dimension_numbers=('NCHW', 'OIHW', 'NCHW'))
    y = (y - rm[None, :, None, None]) / jnp.sqrt(rv[None, :, None, None] + eps)
    y = y * gamma[None, :, None, None] + beta[None, :, None, None]
    return jnp.maximum(y, 0.0)


def _run_case(key, *, N, Cin, Cout, H, W, K, stride, padding,
              compute_dtype=jnp.float32, atol=2e-4, rtol=2e-4):
    kx, kw, kg, kb, km, kv = jax.random.split(key, 6)
    x = jax.random.normal(kx, (N, Cin, H, W), dtype=jnp.float32)
    w = jax.random.normal(kw, (Cout, Cin, K, K), dtype=jnp.float32) * 0.3
    gamma = jax.random.uniform(kg, (Cout,), jnp.float32, 0.5, 1.5)
    beta = jax.random.normal(kb, (Cout,), dtype=jnp.float32) * 0.1
    rm = jax.random.normal(km, (Cout,), dtype=jnp.float32) * 0.1
    rv = jax.random.uniform(kv, (Cout,), jnp.float32, 0.5, 1.5)

    out = conv_layer(x, w, gamma, beta, rm, rv, stride=stride, padding=padding,
                     compute_dtype=compute_dtype)
    out = jax.block_until_ready(out)
    ref = _reference(x, w, gamma, beta, rm, rv, stride=stride, padding=padding)
    assert out.shape == ref.shape, (out.shape, ref.shape)
    err = float(jnp.max(jnp.abs(out - ref)))
    assert jnp.allclose(out, ref, atol=atol, rtol=rtol), (
        f"mismatch vs reference (max abs diff {err:.3e})")


if __name__ == "__main__":
    key = jax.random.PRNGKey(0)
    k1, k2, k3 = jax.random.split(key, 3)

    # 3x3, stride 1, pad 1 (typical ConvLayer config): halo + tap-packed matmul.
    _run_case(k1, N=2, Cin=4, Cout=8, H=16, W=16, K=3, stride=1, padding=1)
    # 1x1, stride 1, pad 0 (pointwise config; no-scratch direct path).
    _run_case(k2, N=2, Cin=8, Cout=16, H=16, W=16, K=1, stride=1, padding=0)
    # bf16 compute path (f32 MXU accumulation), looser tolerance.
    _run_case(k3, N=1, Cin=8, Cout=16, H=16, W=16, K=3, stride=1, padding=1,
              compute_dtype=jnp.bfloat16, atol=1e-1, rtol=5e-2)

    print("KERNEL_OK")
</pallas_src>

<mosaic_0001>
module attributes {stable_mosaic.version = 11 : i64} {
  func.func @kernel(%arg0: i32, %arg1: i32, %arg2: memref<1x16x16x4xf32, #tpu.memory_space<vmem>>, %arg3: memref<36x8xf32, #tpu.memory_space<vmem>>, %arg4: memref<1x8xf32, #tpu.memory_space<vmem>>, %arg5: memref<1x256x8xf32, #tpu.memory_space<vmem>>, %arg6: memref<18x18x4xf32, #tpu.memory_space<vmem>>, %arg7: memref<16x16x36xf32, #tpu.memory_space<vmem>>) attributes {dimension_semantics = [#tpu.dimension_semantics<parallel>, #tpu.dimension_semantics<arbitrary>], iteration_bounds = array<i64: 2, 1>, scalar_prefetch = 0 : i64, scratch_operands = 2 : i64, tpu.core_type = #tpu.core_type<tc>, window_params = [{transform_indices = @transform_0, window_bounds = array<i64: 1, 16, 16, 4>}, {transform_indices = @transform_1, window_bounds = array<i64: 36, 8>}, {transform_indices = @transform_2, window_bounds = array<i64: 1, 8>}, {transform_indices = @transform_3, window_bounds = array<i64: 1, 256, 8>}]} {
    %c0_i32 = arith.constant 0 : i32
    %0 = arith.cmpi eq, %arg1, %c0_i32 : i32
    %1 = arith.extui %0 : i1 to i32
    %c0_i32_0 = arith.constant 0 : i32
    %2 = arith.cmpi ne, %1, %c0_i32_0 : i32
    scf.if %2 {
      %cst_11 = arith.constant 0.000000e+00 : f32
      %15 = vector.broadcast %cst_11 : f32 to vector<1x18x4xf32>
      %c0_12 = arith.constant 0 : index
      %c0_13 = arith.constant 0 : index
      %c0_14 = arith.constant 0 : index
      %16 = vector.load %arg6[%c0_12, %c0_13, %c0_14] : memref<18x18x4xf32, #tpu.memory_space<vmem>>, vector<1x18x4xf32>
      tpu.vector_store %arg6[%c0_12, %c0_13, %c0_14], %15 {strides = array<i32>} : memref<18x18x4xf32, #tpu.memory_space<vmem>>, vector<1x18x4xf32>,
      %c17 = arith.constant 17 : index
      %c0_15 = arith.constant 0 : index
      %c0_16 = arith.constant 0 : index
      %17 = vector.load %arg6[%c17, %c0_15, %c0_16] : memref<18x18x4xf32, #tpu.memory_space<vmem>>, vector<1x18x4xf32>
      tpu.vector_store %arg6[%c17, %c0_15, %c0_16], %15 {strides = array<i32>} : memref<18x18x4xf32, #tpu.memory_space<vmem>>, vector<1x18x4xf32>,
      %cst_17 = arith.constant 0.000000e+00 : f32
      %18 = vector.broadcast %cst_17 : f32 to vector<16x1x4xf32>
      %c1 = arith.constant 1 : index
      %c0_18 = arith.constant 0 : index
      %c0_19 = arith.constant 0 : index
      %19 = vector.load %arg6[%c1, %c0_18, %c0_19] : memref<18x18x4xf32, #tpu.memory_space<vmem>>, vector<16x1x4xf32>
      tpu.vector_store %arg6[%c1, %c0_18, %c0_19], %18 {strides = array<i32>} : memref<18x18x4xf32, #tpu.memory_space<vmem>>, vector<16x1x4xf32>,
      %c1_20 = arith.constant 1 : index
      %c17_21 = arith.constant 17 : index
      %c0_22 = arith.constant 0 : index
      %20 = vector.load %arg6[%c1_20, %c17_21, %c0_22] : memref<18x18x4xf32, #tpu.memory_space<vmem>>, vector<16x1x4xf32>
      tpu.vector_store %arg6[%c1_20, %c17_21, %c0_22], %18 {strides = array<i32>} : memref<18x18x4xf32, #tpu.memory_space<vmem>>, vector<16x1x4xf32>,
      %c0_23 = arith.constant 0 : index
      %c0_24 = arith.constant 0 : index
      %c0_25 = arith.constant 0 : index
      %c0_26 = arith.constant 0 : index
      %21 = vector.load %arg2[%c0_23, %c0_24, %c0_25, %c0_26] : memref<1x16x16x4xf32, #tpu.memory_space<vmem>>, vector<1x16x16x4xf32>
      %22 = vector.shape_cast %21 : vector<1x16x16x4xf32> to vector<16x16x4xf32>
      %c1_27 = arith.constant 1 : index
      %c1_28 = arith.constant 1 : index
      %c0_29 = arith.constant 0 : index
      %23 = vector.load %arg6[%c1_27, %c1_28, %c0_29] : memref<18x18x4xf32, #tpu.memory_space<vmem>>, vector<16x16x4xf32>
      tpu.vector_store %arg6[%c1_27, %c1_28, %c0_29], %22 {strides = array<i32>} : memref<18x18x4xf32, #tpu.memory_space<vmem>>, vector<16x16x4xf32>,
      %c0_30 = arith.constant 0 : index
      %c0_31 = arith.constant 0 : index
      %c0_32 = arith.constant 0 : index
      %24 = vector.load %arg6[%c0_30, %c0_31, %c0_32] : memref<18x18x4xf32, #tpu.memory_space<vmem>>, vector<16x16x4xf32>
      %c0_33 = arith.constant 0 : index
      %c0_34 = arith.constant 0 : index
      %c0_35 = arith.constant 0 : index
      %25 = vector.load %arg7[%c0_33, %c0_34, %c0_35] : memref<16x16x36xf32, #tpu.memory_space<vmem>>, vector<16x16x4xf32>
      tpu.vector_store %arg7[%c0_33, %c0_34, %c0_35], %24 {strides = array<i32>} : memref<16x16x36xf32, #tpu.memory_space<vmem>>, vector<16x16x4xf32>,
      %c0_36 = arith.constant 0 : index
      %c1_37 = arith.constant 1 : index
      %c0_38 = arith.constant 0 : index
      %26 = vector.load %arg6[%c0_36, %c1_37, %c0_38] : memref<18x18x4xf32, #tpu.memory_space<vmem>>, vector<16x16x4xf32>
      %c0_39 = arith.constant 0 : index
      %c0_40 = arith.constant 0 : index
      %c4 = arith.constant 4 : index
      %27 = vector.load %arg7[%c0_39, %c0_40, %c4] : memref<16x16x36xf32, #tpu.memory_space<vmem>>, vector<16x16x4xf32>
      tpu.vector_store %arg7[%c0_39, %c0_40, %c4], %26 {strides = array<i32>} : memref<16x16x36xf32, #tpu.memory_space<vmem>>, vector<16x16x4xf32>,
      %c0_41 = arith.constant 0 : index
      %c2 = arith.constant 2 : index
      %c0_42 = arith.constant 0 : index
      %28 = vector.load %arg6[%c0_41, %c2, %c0_42] : memref<18x18x4xf32, #tpu.memory_space<vmem>>, vector<16x16x4xf32>
      %c0_43 = arith.constant 0 : index
      %c0_44 = arith.constant 0 : index
      %c8 = arith.constant 8 : index
      %29 = vector.load %arg7[%c0_43, %c0_44, %c8] : memref<16x16x36xf32, #tpu.memory_space<vmem>>, vector<16x16x4xf32>
      tpu.vector_store %arg7[%c0_43, %c0_44, %c8], %28 {strides = array<i32>} : memref<16x16x36xf32, #tpu.memory_space<vmem>>, vector<16x16x4xf32>,
      %c1_45 = arith.constant 1 : index
      %c0_46 = arith.constant 0 : index
      %c0_47 = arith.constant 0 : index
      %30 = vector.load %arg6[%c1_45, %c0_46, %c0_47] : memref<18x18x4xf32, #tpu.memory_space<vmem>>, vector<16x16x4xf32>
      %c0_48 = arith.constant 0 : index
      %c0_49 = arith.constant 0 : index
      %c12 = arith.constant 12 : index
      %31 = vector.load %arg7[%c0_48, %c0_49, %c12] : memref<16x16x36xf32, #tpu.memory_space<vmem>>, vector<16x16x4xf32>
      tpu.vector_store %arg7[%c0_48, %c0_49, %c12], %30 {strides = array<i32>} : memref<16x16x36xf32, #tpu.memory_space<vmem>>, vector<16x16x4xf32>,
      %c1_50 = arith.constant 1 : index
      %c1_51 = arith.constant 1 : index
      %c0_52 = arith.constant 0 : index
      %32 = vector.load %arg6[%c1_50, %c1_51, %c0_52] : memref<18x18x4xf32, #tpu.memory_space<vmem>>, vector<16x16x4xf32>
      %c0_53 = arith.constant 0 : index
      %c0_54 = arith.constant 0 : index
      %c16 = arith.constant 16 : index
      %33 = vector.load %arg7[%c0_53, %c0_54, %c16] : memref<16x16x36xf32, #tpu.memory_space<vmem>>, vector<16x16x4xf32>
      tpu.vector_store %arg7[%c0_53, %c0_54, %c16], %32 {strides = array<i32>} : memref<16x16x36xf32, #tpu.memory_space<vmem>>, vector<16x16x4xf32>,
      %c1_55 = arith.constant 1 : index
      %c2_56 = arith.constant 2 : index
      %c0_57 = arith.constant 0 : index
      %34 = vector.load %arg6[%c1_55, %c2_56, %c0_57] : memref<18x18x4xf32, #tpu.memory_space<vmem>>, vector<16x16x4xf32>
      %c0_58 = arith.constant 0 : index
      %c0_59 = arith.constant 0 : index
      %c20 = arith.constant 20 : index
      %35 = vector.load %arg7[%c0_58, %c0_59, %c20] : memref<16x16x36xf32, #tpu.memory_space<vmem>>, vector<16x16x4xf32>
      tpu.vector_store %arg7[%c0_58, %c0_59, %c20], %34 {strides = array<i32>} : memref<16x16x36xf32, #tpu.memory_space<vmem>>, vector<16x16x4xf32>,
      %c2_60 = arith.constant 2 : index
      %c0_61 = arith.constant 0 : index
      %c0_62 = arith.constant 0 : index
      %36 = vector.load %arg6[%c2_60, %c0_61, %c0_62] : memref<18x18x4xf32, #tpu.memory_space<vmem>>, vector<16x16x4xf32>
      %c0_63 = arith.constant 0 : index
      %c0_64 = arith.constant 0 : index
      %c24 = arith.constant 24 : index
      %37 = vector.load %arg7[%c0_63, %c0_64, %c24] : memref<16x16x36xf32, #tpu.memory_space<vmem>>, vector<16x16x4xf32>
      tpu.vector_store %arg7[%c0_63, %c0_64, %c24], %36 {strides = array<i32>} : memref<16x16x36xf32, #tpu.memory_space<vmem>>, vector<16x16x4xf32>,
      %c2_65 = arith.constant 2 : index
      %c1_66 = arith.constant 1 : index
      %c0_67 = arith.constant 0 : index
      %38 = vector.load %arg6[%c2_65, %c1_66, %c0_67] : memref<18x18x4xf32, #tpu.memory_space<vmem>>, vector<16x16x4xf32>
      %c0_68 = arith.constant 0 : index
      %c0_69 = arith.constant 0 : index
      %c28 = arith.constant 28 : index
      %39 = vector.load %arg7[%c0_68, %c0_69, %c28] : memref<16x16x36xf32, #tpu.memory_space<vmem>>, vector<16x16x4xf32>
      tpu.vector_store %arg7[%c0_68, %c0_69, %c28], %38 {strides = array<i32>} : memref<16x16x36xf32, #tpu.memory_space<vmem>>, vector<16x16x4xf32>,
      %c2_70 = arith.constant 2 : index
      %c2_71 = arith.constant 2 : index
      %c0_72 = arith.constant 0 : index
      %40 = vector.load %arg6[%c2_70, %c2_71, %c0_72] : memref<18x18x4xf32, #tpu.memory_space<vmem>>, vector<16x16x4xf32>
      %c0_73 = arith.constant 0 : index
      %c0_74 = arith.constant 0 : index
      %c32 = arith.constant 32 : index
      %41 = vector.load %arg7[%c0_73, %c0_74, %c32] : memref<16x16x36xf32, #tpu.memory_space<vmem>>, vector<16x16x4xf32>
      tpu.vector_store %arg7[%c0_73, %c0_74, %c32], %40 {strides = array<i32>} : memref<16x16x36xf32, #tpu.memory_space<vmem>>, vector<16x16x4xf32>,
    } else {
    }
    %c0 = arith.constant 0 : index
    %c0_1 = arith.constant 0 : index
    %c0_2 = arith.constant 0 : index
    %3 = vector.load %arg7[%c0, %c0_1, %c0_2] : memref<16x16x36xf32, #tpu.memory_space<vmem>>, vector<16x16x36xf32>
    %4 = vector.shape_cast %3 : vector<16x16x36xf32> to vector<256x36xf32>
    %c0_3 = arith.constant 0 : index
    %c0_4 = arith.constant 0 : index
    %5 = vector.load %arg3[%c0_3, %c0_4] : memref<36x8xf32, #tpu.memory_space<vmem>>, vector<36x8xf32>
    %cst = arith.constant dense<0.000000e+00> : vector<256x8xf32>
    %6 = tpu.matmul %4, %5, %cst {dimension_numbers = #tpu.dot_dimension_numbers<[1], [0], [0], [1], [0, 0, 1, 1], [], []>} : vector<256x36xf32>, vector<36x8xf32>, vector<256x8xf32> -> vector<256x8xf32>
    %c0_5 = arith.constant 0 : index
    %c0_6 = arith.constant 0 : index
    %7 = vector.load %arg4[%c0_5, %c0_6] : memref<1x8xf32, #tpu.memory_space<vmem>>, vector<1x8xf32>
    %8 = vector.broadcast %7 : vector<1x8xf32> to vector<256x8xf32>
    %9 = arith.addf %6, %8 : vector<256x8xf32>
    %cst_7 = arith.constant 0.000000e+00 : f32
    %10 = vector.broadcast %cst_7 : f32 to vector<256x8xf32>
    %11 = arith.maximumf %9, %10 : vector<256x8xf32>
    %c0_8 = arith.constant 0 : index
    %c0_9 = arith.constant 0 : index
    %c0_10 = arith.constant 0 : index
    %12 = vector.load %arg5[%c0_8, %c0_9, %c0_10] : memref<1x256x8xf32, #tpu.memory_space<vmem>>, vector<1x256x8xf32>
    %13 = vector.shape_cast %12 : vector<1x256x8xf32> to vector<256x8xf32>
    %14 = vector.shape_cast %11 : vector<256x8xf32> to vector<1x256x8xf32>
    tpu.vector_store %arg5[%c0_8, %c0_9, %c0_10], %14 {strides = array<i32>} : memref<1x256x8xf32, #tpu.memory_space<vmem>>, vector<1x256x8xf32>,
    return
  }
  func.func @transform_0(%arg0: i32, %arg1: i32) -> (i32, i32, i32, i32) {
    %c0_i32 = arith.constant 0 : i32
    %c0_i32_0 = arith.constant 0 : i32
    %c0_i32_1 = arith.constant 0 : i32
    %c0_i32_2 = arith.constant 0 : i32
    return %arg0, %c0_i32, %c0_i32_0, %c0_i32_1 : i32, i32, i32, i32
  }
  func.func @transform_1(%arg0: i32, %arg1: i32) -> (i32, i32) {
    %c0_i32 = arith.constant 0 : i32
    %c0_i32_0 = arith.constant 0 : i32
    return %c0_i32, %arg1 : i32, i32
  }
  func.func @transform_2(%arg0: i32, %arg1: i32) -> (i32, i32) {
    %c0_i32 = arith.constant 0 : i32
    %c0_i32_0 = arith.constant 0 : i32
    return %c0_i32, %arg1 : i32, i32
  }
  func.func @transform_3(%arg0: i32, %arg1: i32) -> (i32, i32, i32) {
    %c0_i32 = arith.constant 0 : i32
    %c0_i32_0 = arith.constant 0 : i32
    return %arg0, %c0_i32, %arg1 : i32, i32, i32
  }
}

</mosaic_0001>

<llo_original>
// kernel: tpu_custom_call.1
$region0: #{tpu_custom_call.1}
  #allocation0 [shape = 'u32[]', space=smem, size = 0x4, offset = 0x4, fixed_abs, tag = 'smem constant byte address 0x4 - core index']
  #allocation1 [shape = 'u32[144,128]{1,0:T(1,128)}', space=vmem, size = 0x12000, scoped, tag = 'internal scratch']
  #allocation2 [shape = 'f32[18,18,4]{2,1,0:T(8,128)}', space=vmem, size = 0x36000, scoped, tag = 'scratch operand']
  #allocation3 [shape = 'f32[16,16,36]{2,1,0:T(8,128)}', space=vmem, size = 0x20000, scoped, tag = 'scratch operand']
  %s0 = inlined_call_operand.vmem [shape: f32[2,16,16,4], index: 0, kind: input, shape index: {}]
  %s1 = inlined_call_operand.vmem [shape: f32[36,8], index: 1, kind: input, shape index: {}]
  %s2 = inlined_call_operand.vmem [shape: f32[1,8], index: 2, kind: input, shape index: {}]
  %s3 = inlined_call_operand.vmem [shape: f32[2,256,8], index: 3, kind: output, shape index: {}]
  %s4 = sld [smem:[#allocation0]]
  $region49: #{tpu_custom_call.1} parent=0
    _
  %s6 = ssub.s32 1, %s4
  %s7 = scalar_select 0, %s6, %s4
  loop: start=0, step=1, limit=4
  $region2: #{tpu_custom_call.1} parent=0 // loop_pre_header
    _
  $region3: #{tpu_custom_call.1} parent=0 // loop_header
    %s9 = sphi 0, %s13
    %p10 = scmp.ge.s32.totalorder %s9, 4
    %s16 = sphi 0, %s28
    %s17 = sphi 0, %s24
    %s18 = sphi 0, %s16
    %s19 = sphi 0, %s17
    %s20 = sphi 0, %s18
    %s21 = sphi 0, %s19
    %s31 = sphi 0, %s33
    %s34 = sphi 0, %s31
    %s35 = sphi 0, %s34
    %s51 = sphi 0, %s35
    %s57 = sphi 0, %s59
    %s60 = sphi 0, %s57
    %s61 = sphi 0, %s60
    %s77 = sphi 0, %s61
    %s83 = sphi 0, %s85
    %s86 = sphi 0, %s83
    %s87 = sphi 0, %s86
    %s103 = sphi 0, %s87
    %s111 = sphi 0, %s113
    %s114 = sphi 0, %s111
    %s115 = sphi 0, %s114
    %s131 = sphi 0, %s115
  $region4: #{tpu_custom_call.1} parent=0 // loop_header_branch
    %12 = sbr.rel (%p10) target = $region8
  $region5: #{tpu_custom_call.1} parent=0 // loop_body
    %s14 = ssub.s32 %s9, 1
    %s15 = ssub.s32 %s9, 2
    %s22 = sadd.s32 1, %s17
    %p23 = scmp.ge.s32.totalorder %s22, 1
    %s24 = scalar_select %p23, 0, %s22
    %s25 = sadd.s32 1, %s16
    %s26 = scalar_select %p23, %s25, %s16
    %p27 = scmp.ge.s32.totalorder %s26, 2
    %s28 = scalar_select %p27, 0, %s26
    %s29 = ssub.s32 %s16, %s28
    %p30 = scmp.eq.s32.totalorder %s29, 0
    %s32 = sadd.s32 %s31, 1
    %s33 = scalar_select %p30, %s31, %s32
    %p36 = pneg %p30
    %p37 = scmp.eq.s32.totalorder %s9, 1
    %p38 = por %p36, %p37
    %p39 = scmp.ne.s32.totalorder %s31, %s34
    %p40 = scmp.eq.s32.totalorder %s9, 0
    %p41 = por %p39, %p40
    %p42 = scmp.ne.s32.totalorder %s31, %s34
    %p43 = scmp.eq.s32.totalorder %s14, 1
    %p44 = por %p42, %p43
    %p45 = scmp.ne.s32.totalorder %s34, %s35
    %p46 = scmp.eq.s32.totalorder %s14, 0
    %p47 = por %p45, %p46
    %p48 = scmp.ne.s32.totalorder %s34, %s35
    %p49 = scmp.eq.s32.totalorder %s15, 1
    %p50 = por %p48, %p49
    %p52 = scmp.ne.s32.totalorder %s35, %s51
    %p53 = scmp.eq.s32.totalorder %s15, 0
    %p54 = por %p52, %p53
    %s55 = ssub.s32 %s17, %s24
    %p56 = scmp.eq.s32.totalorder %s55, 0
    %s58 = sadd.s32 %s57, 1
    %s59 = scalar_select %p56, %s57, %s58
    %p62 = pneg %p56
    %p63 = scmp.eq.s32.totalorder %s9, 1
    %p64 = por %p62, %p63
    %p65 = scmp.ne.s32.totalorder %s57, %s60
    %p66 = scmp.eq.s32.totalorder %s9, 0
    %p67 = por %p65, %p66
    %p68 = scmp.ne.s32.totalorder %s57, %s60
    %p69 = scmp.eq.s32.totalorder %s14, 1
    %p70 = por %p68, %p69
    %p71 = scmp.ne.s32.totalorder %s60, %s61
    %p72 = scmp.eq.s32.totalorder %s14, 0
    %p73 = por %p71, %p72
    %p74 = scmp.ne.s32.totalorder %s60, %s61
    %p75 = scmp.eq.s32.totalorder %s15, 1
    %p76 = por %p74, %p75
    %p78 = scmp.ne.s32.totalorder %s61, %s77
    %p79 = scmp.eq.s32.totalorder %s15, 0
    %p80 = por %p78, %p79
    %s81 = ssub.s32 %s17, %s24
    %p82 = scmp.eq.s32.totalorder %s81, 0
    %s84 = sadd.s32 %s83, 1
    %s85 = scalar_select %p82, %s83, %s84
    %p88 = pneg %p82
    %p89 = scmp.eq.s32.totalorder %s9, 1
    %p90 = por %p88, %p89
    %p91 = scmp.ne.s32.totalorder %s83, %s86
    %p92 = scmp.eq.s32.totalorder %s9, 0
    %p93 = por %p91, %p92
    %p94 = scmp.ne.s32.totalorder %s83, %s86
    %p95 = scmp.eq.s32.totalorder %s14, 1
    %p96 = por %p94, %p95
    %p97 = scmp.ne.s32.totalorder %s86, %s87
    %p98 = scmp.eq.s32.totalorder %s14, 0
    %p99 = por %p97, %p98
    %p100 = scmp.ne.s32.totalorder %s86, %s87
    %p101 = scmp.eq.s32.totalorder %s15, 1
    %p102 = por %p100, %p101
    %p104 = scmp.ne.s32.totalorder %s87, %s103
    %p105 = scmp.eq.s32.totalorder %s15, 0
    %p106 = por %p104, %p105
    %s107 = ssub.s32 %s16, %s28
    %s108 = ssub.s32 %s17, %s24
    %s109 = sor.u32 %s107, %s108
    %p110 = scmp.eq.s32.totalorder %s109, 0
    %s112 = sadd.s32 %s111, 1
    %s113 = scalar_select %p110, %s111, %s112
    %p116 = pneg %p110
    %p117 = scmp.eq.s32.totalorder %s9, 1
    %p118 = por %p116, %p117
    %p119 = scmp.ne.s32.totalorder %s111, %s114
    %p120 = scmp.eq.s32.totalorder %s9, 0
    %p121 = por %p119, %p120
    %p122 = scmp.ne.s32.totalorder %s111, %s114
    %p123 = scmp.eq.s32.totalorder %s14, 1
    %p124 = por %p122, %p123
    %p125 = scmp.ne.s32.totalorder %s114, %s115
    %p126 = scmp.eq.s32.totalorder %s14, 0
    %p127 = por %p125, %p126
    %p128 = scmp.ne.s32.totalorder %s114, %s115
    %p129 = scmp.eq.s32.totalorder %s15, 1
    %p130 = por %p128, %p129
    %p132 = scmp.ne.s32.totalorder %s115, %s131
    %p133 = scmp.eq.s32.totalorder %s15, 0
    %p134 = por %p132, %p133
    %p135 = scmp.le.s32.totalorder 1, %s9
    %p136 = scmp.lt.s32.totalorder %s9, 3
    %p137 = pnand %p135, %p136
    %p138 = pneg %p137
    // Predicated region
    $region9: #{tpu_custom_call.1} parent=5 // pred_check
      _
    $region10: #{tpu_custom_call.1} parent=5 // pred_check_branch
      %140 = sbr.rel (%p137) target = $region12
    $region11: #{tpu_custom_call.1} parent=5 // pred_region
      %s141 = ssub.s32 %s9, 1
      // Predicated region
      $region13: #{tpu_custom_call.1} parent=11 // pred_check
        %p142 = pneg %p73
      $region14: #{tpu_custom_call.1} parent=11 // pred_check_branch
        %144 = sbr.rel (%p142) target = $region16
      $region15: #{tpu_custom_call.1} parent=11 // pred_region
        %p145 = scmp.lt.s32.totalorder %s19, 0
        %s146 = scalar_select %p145, %s19, 0
        %s147 = smul.addr %s146, 8
        %s148 = scalar_lea.vmem %s1, %s147
      $region16: #{tpu_custom_call.1} parent=11 // pred_fallthru
        _
      // Predicated region
      $region17: #{tpu_custom_call.1} parent=11 // pred_check
        %p149 = pneg %p99
      $region18: #{tpu_custom_call.1} parent=11 // pred_check_branch
        %151 = sbr.rel (%p149) target = $region20
      $region19: #{tpu_custom_call.1} parent=11 // pred_region
        %p152 = scmp.lt.s32.totalorder %s19, 0
        %s153 = scalar_select %p152, %s19, 0
        %s154 = scalar_lea.vmem %s2, %s153
      $region20: #{tpu_custom_call.1} parent=11 // pred_fallthru
        _
    $region12: #{tpu_custom_call.1} parent=5 // pred_fallthru
      _
    %p155 = scmp.lt.s32.totalorder %s9, 2
    // Predicated region
    $region21: #{tpu_custom_call.1} parent=5 // pred_check
      %p156 = pneg %p155
    $region22: #{tpu_custom_call.1} parent=5 // pred_check_branch
      %158 = sbr.rel (%p156) target = $region24
    $region23: #{tpu_custom_call.1} parent=5 // pred_region
      // Predicated region
      $region25: #{tpu_custom_call.1} parent=23 // pred_check
        %p159 = pneg %p41
      $region26: #{tpu_custom_call.1} parent=23 // pred_check_branch
        %161 = sbr.rel (%p159) target = $region28
      $region27: #{tpu_custom_call.1} parent=23 // pred_region
        %p162 = scmp.lt.s32.totalorder %s16, 1
        %s163 = scalar_select %p162, %s16, 1
        %s164 = smul.addr %s163, 32
        %s165 = smul.addr %s164, 8
        %s166 = scalar_lea.vmem %s0, %s165
      $region28: #{tpu_custom_call.1} parent=23 // pred_fallthru
        _
    $region24: #{tpu_custom_call.1} parent=5 // pred_fallthru
      _
    %p167 = scmp.le.s32.totalorder 1, %s9
    %p168 = scmp.lt.s32.totalorder %s9, 3
    %p169 = pnand %p167, %p168
    %p170 = pneg %p169
    // Predicated region
    $region29: #{tpu_custom_call.1} parent=5 // pred_check
      _
    $region30: #{tpu_custom_call.1} parent=5 // pred_check_branch
      %172 = sbr.rel (%p169) target = $region32
    $region31: #{tpu_custom_call.1} parent=5 // pred_region
      %s173 = ssub.s32 %s9, 1
      %p174 = scmp.lt.s32.totalorder %s18, 1
      %s175 = scalar_select %p174, %s18, 1
      %s176 = smul.addr %s175, 32
      %s177 = smul.addr %s176, 8
      %s178 = scalar_lea.vmem %s0, %s177
      %p179 = pneg %p47
      %p180 = pneg %p44
      %p181 = scmp.lt.s32.totalorder %s19, 0
      %s182 = scalar_select %p181, %s19, 0
      %s183 = smul.addr %s182, 8
      %s184 = scalar_lea.vmem %s1, %s183
      %p185 = pneg %p73
      %p186 = pneg %p70
      %p187 = scmp.lt.s32.totalorder %s19, 0
      %s188 = scalar_select %p187, %s19, 0
      %s189 = scalar_lea.vmem %s2, %s188
      %p190 = pneg %p99
      %p191 = pneg %p96
      %p192 = pneg %p127
      %p193 = pneg %p124
      %p194 = scmp.lt.s32.totalorder %s18, 1
      %s195 = scalar_select %p194, %s18, 1
      %p196 = scmp.lt.s32.totalorder %s19, 0
      %s197 = scalar_select %p196, %s19, 0
      %s198 = smul.addr %s195, 32
      %s199 = sadd.s32 %s197, %s198
      %s200 = smul.addr %s199, 8
      %s201 = scalar_lea.vmem %s3, %s200
      %p202 = scmp.lt.s32.totalorder %s18, 1
      %s203 = scalar_select %p202, %s18, 1
      %s204 = smul.addr %s203, 32
      %s205 = smul.addr %s204, 8
      %s206 = scalar_lea.vmem %s0, %s205
      %p207 = scmp.lt.s32.totalorder %s19, 0
      %s208 = scalar_select %p207, %s19, 0
      %s209 = smul.addr %s208, 8
      %s210 = scalar_lea.vmem %s1, %s209
      %p211 = scmp.lt.s32.totalorder %s19, 0
      %s212 = scalar_select %p211, %s19, 0
      %s213 = scalar_lea.vmem %s2, %s212
      %p214 = scmp.lt.s32.totalorder %s18, 1
      %s215 = scalar_select %p214, %s18, 1
      %p216 = scmp.lt.s32.totalorder %s19, 0
      %s217 = scalar_select %p216, %s19, 0
      %s218 = smul.addr %s215, 32
      %s219 = sadd.s32 %s217, %s218
      %s220 = smul.addr %s219, 8
      %s221 = scalar_lea.vmem %s3, %s220
      %p222 = scmp.eq.s32.totalorder %s19, 0
      // Predicated region
      $region33: #{tpu_custom_call.1} parent=31 // pred_check
        %p223 = pneg %p222
      $region34: #{tpu_custom_call.1} parent=31 // pred_check_branch
        %225 = sbr.rel (%p223) target = $region36
      $region35: #{tpu_custom_call.1} parent=31 // pred_region
        %vm226 = vcmask 31744
        %227 = vst.msk [vmem:[#allocation2] sm:$0xff] %vm226, 0.0
        %228 = vst.msk [vmem:[#allocation2 + $0x8] sm:$0xff] %vm226, 0.0
        %vm229 = vcmask 25600
        %230 = vst.msk [vmem:[#allocation2 + $0x10] sm:$0x3] %vm229, 0.0
        %s231 = scalar_lea.vmem [#allocation2], 408
        %232 = vst.msk [vmem:[%s231] sm:$0xff] %vm226, 0.0
        %233 = vst.msk [vmem:[%s231 + $0x8] sm:$0xff] %vm226, 0.0
        %234 = vst.msk [vmem:[%s231 + $0x10] sm:$0x3] %vm229, 0.0
        %s235 = scalar_lea.vmem [#allocation2], 24
        %vm236 = vcmask 24576
        %237 = vst.msk [vmem:[%s235] sm:$0x1] %vm236, 0.0
        %238 = vst.msk [vmem:[%s235 + $0x18] sm:$0x1] %vm236, 0.0
        %239 = vst.msk [vmem:[%s235 + $0x30] sm:$0x1] %vm236, 0.0
        %240 = vst.msk [vmem:[%s235 + $0x48] sm:$0x1] %vm236, 0.0
        %241 = vst.msk [vmem:[%s235 + $0x60] sm:$0x1] %vm236, 0.0
        %242 = vst.msk [vmem:[%s235 + $0x78] sm:$0x1] %vm236, 0.0
        %243 = vst.msk [vmem:[%s235 + $0x90] sm:$0x1] %vm236, 0.0
        %244 = vst.msk [vmem:[%s235 + $0xa8] sm:$0x1] %vm236, 0.0
        %245 = vst.msk [vmem:[%s235 + $0xc0] sm:$0x1] %vm236, 0.0
        %246 = vst.msk [vmem:[%s235 + $0xd8] sm:$0x1] %vm236, 0.0
        %247 = vst.msk [vmem:[%s235 + $0xf0] sm:$0x1] %vm236, 0.0
        %248 = vst.msk [vmem:[%s235 + $0x108] sm:$0x1] %vm236, 0.0
        %249 = vst.msk [vmem:[%s235 + $0x120] sm:$0x1] %vm236, 0.0
        %250 = vst.msk [vmem:[%s235 + $0x138] sm:$0x1] %vm236, 0.0
        %251 = vst.msk [vmem:[%s235 + $0x150] sm:$0x1] %vm236, 0.0
        %252 = vst.msk [vmem:[%s235 + $0x168] sm:$0x1] %vm236, 0.0
        %253 = vst.msk [vmem:[%s235 + $0x11] sm:$0x1] %vm236, 0.0
        %254 = vst.msk [vmem:[%s235 + $0x29] sm:$0x1] %vm236, 0.0
        %255 = vst.msk [vmem:[%s235 + $0x41] sm:$0x1] %vm236, 0.0
        %256 = vst.msk [vmem:[%s235 + $0x59] sm:$0x1] %vm236, 0.0
        %257 = vst.msk [vmem:[%s235 + $0x71] sm:$0x1] %vm236, 0.0
        %258 = vst.msk [vmem:[%s235 + $0x89] sm:$0x1] %vm236, 0.0
        %259 = vst.msk [vmem:[%s235 + $0xa1] sm:$0x1] %vm236, 0.0
        %260 = vst.msk [vmem:[%s235 + $0xb9] sm:$0x1] %vm236, 0.0
        %261 = vst.msk [vmem:[%s235 + $0xd1] sm:$0x1] %vm236, 0.0
        %262 = vst.msk [vmem:[%s235 + $0xe9] sm:$0x1] %vm236, 0.0
        %263 = vst.msk [vmem:[%s235 + $0x101] sm:$0x1] %vm236, 0.0
        %264 = vst.msk [vmem:[%s235 + $0x119] sm:$0x1] %vm236, 0.0
        %265 = vst.msk [vmem:[%s235 + $0x131] sm:$0x1] %vm236, 0.0
        %266 = vst.msk [vmem:[%s235 + $0x149] sm:$0x1] %vm236, 0.0
        %267 = vst.msk [vmem:[%s235 + $0x161] sm:$0x1] %vm236, 0.0
        %268 = vst.msk [vmem:[%s235 + $0x179] sm:$0x1] %vm236, 0.0
        %v269 = vld [vmem:[%s206] sm:$0xff]
        %v270 = vld [vmem:[%s206 + $0x8] sm:$0xff]
        %v271 = vld [vmem:[%s206 + $0x10] sm:$0xff]
        %v272 = vld [vmem:[%s206 + $0x18] sm:$0xff]
        %v273 = vld [vmem:[%s206 + $0x20] sm:$0xff]
        %v274 = vld [vmem:[%s206 + $0x28] sm:$0xff]
        %v275 = vld [vmem:[%s206 + $0x30] sm:$0xff]
        %v276 = vld [vmem:[%s206 + $0x38] sm:$0xff]
        %v277 = vld [vmem:[%s206 + $0x40] sm:$0xff]
        %v278 = vld [vmem:[%s206 + $0x48] sm:$0xff]
        %v279 = vld [vmem:[%s206 + $0x50] sm:$0xff]
        %v280 = vld [vmem:[%s206 + $0x58] sm:$0xff]
        %v281 = vld [vmem:[%s206 + $0x60] sm:$0xff]
        %v282 = vld [vmem:[%s206 + $0x68] sm:$0xff]
        %v283 = vld [vmem:[%s206 + $0x70] sm:$0xff]
        %v284 = vld [vmem:[%s206 + $0x78] sm:$0xff]
        %v285 = vld [vmem:[%s206 + $0x80] sm:$0xff]
        %v286 = vld [vmem:[%s206 + $0x88] sm:$0xff]
        %v287 = vld [vmem:[%s206 + $0x90] sm:$0xff]
        %v288 = vld [vmem:[%s206 + $0x98] sm:$0xff]
        %v289 = vld [vmem:[%s206 + $0xa0] sm:$0xff]
        %v290 = vld [vmem:[%s206 + $0xa8] sm:$0xff]
        %v291 = vld [vmem:[%s206 + $0xb0] sm:$0xff]
        %v292 = vld [vmem:[%s206 + $0xb8] sm:$0xff]
        %v293 = vld [vmem:[%s206 + $0xc0] sm:$0xff]
        %v294 = vld [vmem:[%s206 + $0xc8] sm:$0xff]
        %v295 = vld [vmem:[%s206 + $0xd0] sm:$0xff]
        %v296 = vld [vmem:[%s206 + $0xd8] sm:$0xff]
        %v297 = vld [vmem:[%s206 + $0xe0] sm:$0xff]
        %v298 = vld [vmem:[%s206 + $0xe8] sm:$0xff]
        %v299 = vld [vmem:[%s206 + $0xf0] sm:$0xff]
        %v300 = vld [vmem:[%s206 + $0xf8] sm:$0xff]
        %301 = vst.msk [vmem:[%s235 + $0x1] sm:$0xff] %vm226, %v269
        %302 = vst.msk [vmem:[%s235 + $0x9] sm:$0xff] %vm226, %v270
        %303 = vst.msk [vmem:[%s235 + $0x19] sm:$0xff] %vm226, %v271
        %304 = vst.msk [vmem:[%s235 + $0x21] sm:$0xff] %vm226, %v272
        %305 = vst.msk [vmem:[%s235 + $0x31] sm:$0xff] %vm226, %v273
        %306 = vst.msk [vmem:[%s235 + $0x39] sm:$0xff] %vm226, %v274
        %307 = vst.msk [vmem:[%s235 + $0x49] sm:$0xff] %vm226, %v275
        %308 = vst.msk [vmem:[%s235 + $0x51] sm:$0xff] %vm226, %v276
        %309 = vst.msk [vmem:[%s235 + $0x61] sm:$0xff] %vm226, %v277
        %310 = vst.msk [vmem:[%s235 + $0x69] sm:$0xff] %vm226, %v278
        %311 = vst.msk [vmem:[%s235 + $0x79] sm:$0xff] %vm226, %v279
        %312 = vst.msk [vmem:[%s235 + $0x81] sm:$0xff] %vm226, %v280
        %313 = vst.msk [vmem:[%s235 + $0x91] sm:$0xff] %vm226, %v281
        %314 = vst.msk [vmem:[%s235 + $0x99] sm:$0xff] %vm226, %v282
        %315 = vst.msk [vmem:[%s235 + $0xa9] sm:$0xff] %vm226, %v283
        %316 = vst.msk [vmem:[%s235 + $0xb1] sm:$0xff] %vm226, %v284
        %317 = vst.msk [vmem:[%s235 + $0xc1] sm:$0xff] %vm226, %v285
        %318 = vst.msk [vmem:[%s235 + $0xc9] sm:$0xff] %vm226, %v286
        %319 = vst.msk [vmem:[%s235 + $0xd9] sm:$0xff] %vm226, %v287
        %320 = vst.msk [vmem:[%s235 + $0xe1] sm:$0xff] %vm226, %v288
        %321 = vst.msk [vmem:[%s235 + $0xf1] sm:$0xff] %vm226, %v289
        %322 = vst.msk [vmem:[%s235 + $0xf9] sm:$0xff] %vm226, %v290
        %323 = vst.msk [vmem:[%s235 + $0x109] sm:$0xff] %vm226, %v291
        %324 = vst.msk [vmem:[%s235 + $0x111] sm:$0xff] %vm226, %v292
        %325 = vst.msk [vmem:[%s235 + $0x121] sm:$0xff] %vm226, %v293
        %326 = vst.msk [vmem:[%s235 + $0x129] sm:$0xff] %vm226, %v294
        %327 = vst.msk [vmem:[%s235 + $0x139] sm:$0xff] %vm226, %v295
        %328 = vst.msk [vmem:[%s235 + $0x141] sm:$0xff] %vm226, %v296
        %329 = vst.msk [vmem:[%s235 + $0x151] sm:$0xff] %vm226, %v297
        %330 = vst.msk [vmem:[%s235 + $0x159] sm:$0xff] %vm226, %v298
        %331 = vst.msk [vmem:[%s235 + $0x169] sm:$0xff] %vm226, %v299
        %332 = vst.msk [vmem:[%s235 + $0x171] sm:$0xff] %vm226, %v300
        %v333 = vld [vmem:[#allocation2] sm:$0xff]
        %v334 = vld [vmem:[#allocation2 + $0x8] sm:$0xff]
        %v335 = vld [vmem:[#allocation2 + $0x18] sm:$0xff]
        %v336 = vld [vmem:[#allocation2 + $0x20] sm:$0xff]
        %v337 = vld [vmem:[#allocation2 + $0x30] sm:$0xff]
        %v338 = vld [vmem:[#allocation2 + $0x38] sm:$0xff]
        %v339 = vld [vmem:[#allocation2 + $0x48] sm:$0xff]
        %v340 = vld [vmem:[#allocation2 + $0x50] sm:$0xff]
        %v341 = vld [vmem:[#allocation2 + $0x60] sm:$0xff]
        %v342 = vld [vmem:[#allocation2 + $0x68] sm:$0xff]
        %v343 = vld [vmem:[#allocation2 + $0x78] sm:$0xff]
        %v344 = vld [vmem:[#allocation2 + $0x80] sm:$0xff]
        %v345 = vld [vmem:[#allocation2 + $0x90] sm:$0xff]
        %v346 = vld [vmem:[#allocation2 + $0x98] sm:$0xff]
        %v347 = vld [vmem:[#allocation2 + $0xa8] sm:$0xff]
        %v348 = vld [vmem:[#allocation2 + $0xb0] sm:$0xff]
        %v349 = vld [vmem:[#allocation2 + $0xc0] sm:$0xff]
        %v350 = vld [vmem:[#allocation2 + $0xc8] sm:$0xff]
        %v351 = vld [vmem:[#allocation2 + $0xd8] sm:$0xff]
        %v352 = vld [vmem:[#allocation2 + $0xe0] sm:$0xff]
        %v353 = vld [vmem:[#allocation2 + $0xf0] sm:$0xff]
        %v354 = vld [vmem:[#allocation2 + $0xf8] sm:$0xff]
        %v355 = vld [vmem:[#allocation2 + $0x108] sm:$0xff]
        %v356 = vld [vmem:[#allocation2 + $0x110] sm:$0xff]
        %v357 = vld [vmem:[#allocation2 + $0x120] sm:$0xff]
        %v358 = vld [vmem:[#allocation2 + $0x128] sm:$0xff]
        %v359 = vld [vmem:[#allocation2 + $0x138] sm:$0xff]
        %v360 = vld [vmem:[#allocation2 + $0x140] sm:$0xff]
        %v361 = vld [vmem:[#allocation2 + $0x150] sm:$0xff]
        %v362 = vld [vmem:[#allocation2 + $0x158] sm:$0xff]
        %v363 = vld [vmem:[#allocation2 + $0x168] sm:$0xff]
        %v364 = vld [vmem:[#allocation2 + $0x170] sm:$0xff]
        %365 = vst.msk [vmem:[#allocation3] sm:$0xff] %vm226, %v333
        %366 = vst.msk [vmem:[#allocation3 + $0x8] sm:$0xff] %vm226, %v334
        %367 = vst.msk [vmem:[#allocation3 + $0x10] sm:$0xff] %vm226, %v335
        %368 = vst.msk [vmem:[#allocation3 + $0x18] sm:$0xff] %vm226, %v336
        %369 = vst.msk [vmem:[#allocation3 + $0x20] sm:$0xff] %vm226, %v337
        %370 = vst.msk [vmem:[#allocation3 + $0x28] sm:$0xff] %vm226, %v338
        %371 = vst.msk [vmem:[#allocation3 + $0x30] sm:$0xff] %vm226, %v339
        %372 = vst.msk [vmem:[#allocation3 + $0x38] sm:$0xff] %vm226, %v340
        %373 = vst.msk [vmem:[#allocation3 + $0x40] sm:$0xff] %vm226, %v341
        %374 = vst.msk [vmem:[#allocation3 + $0x48] sm:$0xff] %vm226, %v342
        %375 = vst.msk [vmem:[#allocation3 + $0x50] sm:$0xff] %vm226, %v343
        %376 = vst.msk [vmem:[#allocation3 + $0x58] sm:$0xff] %vm226, %v344
        %377 = vst.msk [vmem:[#allocation3 + $0x60] sm:$0xff] %vm226, %v345
        %378 = vst.msk [vmem:[#allocation3 + $0x68] sm:$0xff] %vm226, %v346
        %379 = vst.msk [vmem:[#allocation3 + $0x70] sm:$0xff] %vm226, %v347
        %380 = vst.msk [vmem:[#allocation3 + $0x78] sm:$0xff] %vm226, %v348
        %381 = vst.msk [vmem:[#allocation3 + $0x80] sm:$0xff] %vm226, %v349
        %382 = vst.msk [vmem:[#allocation3 + $0x88] sm:$0xff] %vm226, %v350
        %383 = vst.msk [vmem:[#allocation3 + $0x90] sm:$0xff] %vm226, %v351
        %384 = vst.msk [vmem:[#allocation3 + $0x98] sm:$0xff] %vm226, %v352
        %385 = vst.msk [vmem:[#allocation3 + $0xa0] sm:$0xff] %vm226, %v353
        %386 = vst.msk [vmem:[#allocation3 + $0xa8] sm:$0xff] %vm226, %v354
        %387 = vst.msk [vmem:[#allocation3 + $0xb0] sm:$0xff] %vm226, %v355
        %388 = vst.msk [vmem:[#allocation3 + $0xb8] sm:$0xff] %vm226, %v356
        %389 = vst.msk [vmem:[#allocation3 + $0xc0] sm:$0xff] %vm226, %v357
        %390 = vst.msk [vmem:[#allocation3 + $0xc8] sm:$0xff] %vm226, %v358
        %391 = vst.msk [vmem:[#allocation3 + $0xd0] sm:$0xff] %vm226, %v359
        %392 = vst.msk [vmem:[#allocation3 + $0xd8] sm:$0xff] %vm226, %v360
        %393 = vst.msk [vmem:[#allocation3 + $0xe0] sm:$0xff] %vm226, %v361
        %394 = vst.msk [vmem:[#allocation3 + $0xe8] sm:$0xff] %vm226, %v362
        %395 = vst.msk [vmem:[#allocation3 + $0xf0] sm:$0xff] %vm226, %v363
        %396 = vst.msk [vmem:[#allocation3 + $0xf8] sm:$0xff] %vm226, %v364
        %v397 = vld [vmem:[#allocation2 + $0x1] sm:$0xff]
        %v398 = vld [vmem:[#allocation2 + $0x9] sm:$0xff]
        %v399 = vld [vmem:[#allocation2 + $0x19] sm:$0xff]
        %v400 = vld [vmem:[#allocation2 + $0x21] sm:$0xff]
        %v401 = vld [vmem:[#allocation2 + $0x31] sm:$0xff]
        %v402 = vld [vmem:[#allocation2 + $0x39] sm:$0xff]
        %v403 = vld [vmem:[#allocation2 + $0x49] sm:$0xff]
        %v404 = vld [vmem:[#allocation2 + $0x51] sm:$0xff]
        %v405 = vld [vmem:[#allocation2 + $0x61] sm:$0xff]
        %v406 = vld [vmem:[#allocation2 + $0x69] sm:$0xff]
        %v407 = vld [vmem:[#allocation2 + $0x79] sm:$0xff]
        %v408 = vld [vmem:[#allocation2 + $0x81] sm:$0xff]
        %v409 = vld [vmem:[#allocation2 + $0x91] sm:$0xff]
        %v410 = vld [vmem:[#allocation2 + $0x99] sm:$0xff]
        %v411 = vld [vmem:[#allocation2 + $0xa9] sm:$0xff]
        %v412 = vld [vmem:[#allocation2 + $0xb1] sm:$0xff]
        %v413 = vld [vmem:[#allocation2 + $0xc1] sm:$0xff]
        %v414 = vld [vmem:[#allocation2 + $0xc9] sm:$0xff]
        %v415 = vld [vmem:[#allocation2 + $0xd9] sm:$0xff]
        %v416 = vld [vmem:[#allocation2 + $0xe1] sm:$0xff]
        %v417 = vld [vmem:[#allocation2 + $0xf1] sm:$0xff]
        %v418 = vld [vmem:[#allocation2 + $0xf9] sm:$0xff]
        %v419 = vld [vmem:[#allocation2 + $0x109] sm:$0xff]
        %v420 = vld [vmem:[#allocation2 + $0x111] sm:$0xff]
        %v421 = vld [vmem:[#allocation2 + $0x121] sm:$0xff]
        %v422 = vld [vmem:[#allocation2 + $0x129] sm:$0xff]
        %v423 = vld [vmem:[#allocation2 + $0x139] sm:$0xff]
        %v424 = vld [vmem:[#allocation2 + $0x141] sm:$0xff]
        %v425 = vld [vmem:[#allocation2 + $0x151] sm:$0xff]
        %v426 = vld [vmem:[#allocation2 + $0x159] sm:$0xff]
        %v427 = vld [vmem:[#allocation2 + $0x169] sm:$0xff]
        %v428 = vld [vmem:[#allocation2 + $0x171] sm:$0xff]
        %461 = vrot.lane.b32.xlu0 %v397, 4
        %v462 = vpop.permute.xlu0 %461
        %463 = vrot.lane.b32.xlu0 %v398, 4
        %v464 = vpop.permute.xlu0 %463
        %465 = vrot.lane.b32.xlu0 %v399, 4
        %v466 = vpop.permute.xlu0 %465
        %467 = vrot.lane.b32.xlu0 %v400, 4
        %v468 = vpop.permute.xlu0 %467
        %469 = vrot.lane.b32.xlu0 %v401, 4
        %v470 = vpop.permute.xlu0 %469
        %471 = vrot.lane.b32.xlu0 %v402, 4
        %v472 = vpop.permute.xlu0 %471
        %473 = vrot.lane.b32.xlu0 %v403, 4
        %v474 = vpop.permute.xlu0 %473
        %475 = vrot.lane.b32.xlu0 %v404, 4
        %v476 = vpop.permute.xlu0 %475
        %477 = vrot.lane.b32.xlu0 %v405, 4
        %v478 = vpop.permute.xlu0 %477
        %479 = vrot.lane.b32.xlu0 %v406, 4
        %v480 = vpop.permute.xlu0 %479
        %481 = vrot.lane.b32.xlu0 %v407, 4
        %v482 = vpop.permute.xlu0 %481
        %483 = vrot.lane.b32.xlu0 %v408, 4
        %v484 = vpop.permute.xlu0 %483
        %485 = vrot.lane.b32.xlu0 %v409, 4
        %v486 = vpop.permute.xlu0 %485
        %487 = vrot.lane.b32.xlu0 %v410, 4
        %v488 = vpop.permute.xlu0 %487
        %489 = vrot.lane.b32.xlu0 %v411, 4
        %v490 = vpop.permute.xlu0 %489
        %491 = vrot.lane.b32.xlu0 %v412, 4
        %v492 = vpop.permute.xlu0 %491
        %493 = vrot.lane.b32.xlu0 %v413, 4
        %v494 = vpop.permute.xlu0 %493
        %495 = vrot.lane.b32.xlu0 %v414, 4
        %v496 = vpop.permute.xlu0 %495
        %497 = vrot.lane.b32.xlu0 %v415, 4
        %v498 = vpop.permute.xlu0 %497
        %499 = vrot.lane.b32.xlu0 %v416, 4
        %v500 = vpop.permute.xlu0 %499
        %501 = vrot.lane.b32.xlu0 %v417, 4
        %v502 = vpop.permute.xlu0 %501
        %503 = vrot.lane.b32.xlu0 %v418, 4
        %v504 = vpop.permute.xlu0 %503
        %505 = vrot.lane.b32.xlu0 %v419, 4
        %v506 = vpop.permute.xlu0 %505
        %507 = vrot.lane.b32.xlu0 %v420, 4
        %v508 = vpop.permute.xlu0 %507
        %509 = vrot.lane.b32.xlu0 %v421, 4
        %v510 = vpop.permute.xlu0 %509
        %511 = vrot.lane.b32.xlu0 %v422, 4
        %v512 = vpop.permute.xlu0 %511
        %513 = vrot.lane.b32.xlu0 %v423, 4
        %v514 = vpop.permute.xlu0 %513
        %515 = vrot.lane.b32.xlu0 %v424, 4
        %v516 = vpop.permute.xlu0 %515
        %517 = vrot.lane.b32.xlu0 %v425, 4
        %v518 = vpop.permute.xlu0 %517
        %519 = vrot.lane.b32.xlu0 %v426, 4
        %v520 = vpop.permute.xlu0 %519
        %521 = vrot.lane.b32.xlu0 %v427, 4
        %v522 = vpop.permute.xlu0 %521
        %523 = vrot.lane.b32.xlu0 %v428, 4
        %v524 = vpop.permute.xlu0 %523
        %vm557 = vcmask 64544
        %558 = vst.msk [vmem:[#allocation3] sm:$0xff] %vm557, %v462
        %559 = vst.msk [vmem:[#allocation3 + $0x8] sm:$0xff] %vm557, %v464
        %560 = vst.msk [vmem:[#allocation3 + $0x10] sm:$0xff] %vm557, %v466
        %561 = vst.msk [vmem:[#allocation3 + $0x18] sm:$0xff] %vm557, %v468
        %562 = vst.msk [vmem:[#allocation3 + $0x20] sm:$0xff] %vm557, %v470
        %563 = vst.msk [vmem:[#allocation3 + $0x28] sm:$0xff] %vm557, %v472
        %564 = vst.msk [vmem:[#allocation3 + $0x30] sm:$0xff] %vm557, %v474
        %565 = vst.msk [vmem:[#allocation3 + $0x38] sm:$0xff] %vm557, %v476
        %566 = vst.msk [vmem:[#allocation3 + $0x40] sm:$0xff] %vm557, %v478
        %567 = vst.msk [vmem:[#allocation3 + $0x48] sm:$0xff] %vm557, %v480
        %568 = vst.msk [vmem:[#allocation3 + $0x50] sm:$0xff] %vm557, %v482
        %569 = vst.msk [vmem:[#allocation3 + $0x58] sm:$0xff] %vm557, %v484
        %570 = vst.msk [vmem:[#allocation3 + $0x60] sm:$0xff] %vm557, %v486
        %571 = vst.msk [vmem:[#allocation3 + $0x68] sm:$0xff] %vm557, %v488
        %572 = vst.msk [vmem:[#allocation3 + $0x70] sm:$0xff] %vm557, %v490
        %573 = vst.msk [vmem:[#allocation3 + $0x78] sm:$0xff] %vm557, %v492
        %574 = vst.msk [vmem:[#allocation3 + $0x80] sm:$0xff] %vm557, %v494
        %575 = vst.msk [vmem:[#allocation3 + $0x88] sm:$0xff] %vm557, %v496
        %576 = vst.msk [vmem:[#allocation3 + $0x90] sm:$0xff] %vm557, %v498
        %577 = vst.msk [vmem:[#allocation3 + $0x98] sm:$0xff] %vm557, %v500
        %578 = vst.msk [vmem:[#allocation3 + $0xa0] sm:$0xff] %vm557, %v502
        %579 = vst.msk [vmem:[#allocation3 + $0xa8] sm:$0xff] %vm557, %v504
        %580 = vst.msk [vmem:[#allocation3 + $0xb0] sm:$0xff] %vm557, %v506
        %581 = vst.msk [vmem:[#allocation3 + $0xb8] sm:$0xff] %vm557, %v508
        %582 = vst.msk [vmem:[#allocation3 + $0xc0] sm:$0xff] %vm557, %v510
        %583 = vst.msk [vmem:[#allocation3 + $0xc8] sm:$0xff] %vm557, %v512
        %584 = vst.msk [vmem:[#allocation3 + $0xd0] sm:$0xff] %vm557, %v514
        %585 = vst.msk [vmem:[#allocation3 + $0xd8] sm:$0xff] %vm557, %v516
        %586 = vst.msk [vmem:[#allocation3 + $0xe0] sm:$0xff] %vm557, %v518
        %587 = vst.msk [vmem:[#allocation3 + $0xe8] sm:$0xff] %vm557, %v520
        %588 = vst.msk [vmem:[#allocation3 + $0xf0] sm:$0xff] %vm557, %v522
        %589 = vst.msk [vmem:[#allocation3 + $0xf8] sm:$0xff] %vm557, %v524
        %v590 = vld [vmem:[#allocation2 + $0x2] sm:$0xff]
        %v591 = vld [vmem:[#allocation2 + $0xa] sm:$0xff]
        %v592 = vld [vmem:[#allocation2 + $0x1a] sm:$0xff]
        %v593 = vld [vmem:[#allocation2 + $0x22] sm:$0xff]
        %v594 = vld [vmem:[#allocation2 + $0x32] sm:$0xff]
        %v595 = vld [vmem:[#allocation2 + $0x3a] sm:$0xff]
        %v596 = vld [vmem:[#allocation2 + $0x4a] sm:$0xff]
        %v597 = vld [vmem:[#allocation2 + $0x52] sm:$0xff]
        %v598 = vld [vmem:[#allocation2 + $0x62] sm:$0xff]
        %v599 = vld [vmem:[#allocation2 + $0x6a] sm:$0xff]
        %v600 = vld [vmem:[#allocation2 + $0x7a] sm:$0xff]
        %v601 = vld [vmem:[#allocation2 + $0x82] sm:$0xff]
        %v602 = vld [vmem:[#allocation2 + $0x92] sm:$0xff]
        %v603 = vld [vmem:[#allocation2 + $0x9a] sm:$0xff]
        %v604 = vld [vmem:[#allocation2 + $0xaa] sm:$0xff]
        %v605 = vld [vmem:[#allocation2 + $0xb2] sm:$0xff]
        %v606 = vld [vmem:[#allocation2 + $0xc2] sm:$0xff]
        %v607 = vld [vmem:[#allocation2 + $0xca] sm:$0xff]
        %v608 = vld [vmem:[#allocation2 + $0xda] sm:$0xff]
        %v609 = vld [vmem:[#allocation2 + $0xe2] sm:$0xff]
        %v610 = vld [vmem:[#allocation2 + $0xf2] sm:$0xff]
        %v611 = vld [vmem:[#allocation2 + $0xfa] sm:$0xff]
        %v612 = vld [vmem:[#allocation2 + $0x10a] sm:$0xff]
        %v613 = vld [vmem:[#allocation2 + $0x112] sm:$0xff]
        %v614 = vld [vmem:[#allocation2 + $0x122] sm:$0xff]
        %v615 = vld [vmem:[#allocation2 + $0x12a] sm:$0xff]
        %v616 = vld [vmem:[#allocation2 + $0x13a] sm:$0xff]
        %v617 = vld [vmem:[#allocation2 + $0x142] sm:$0xff]
        %v618 = vld [vmem:[#allocation2 + $0x152] sm:$0xff]
        %v619 = vld [vmem:[#allocation2 + $0x15a] sm:$0xff]
        %v620 = vld [vmem:[#allocation2 + $0x16a] sm:$0xff]
        %v621 = vld [vmem:[#allocation2 + $0x172] sm:$0xff]
        %654 = vrot.lane.b32.xlu0 %v590, 8
        %v655 = vpop.permute.xlu0 %654
        %656 = vrot.lane.b32.xlu0 %v591, 8
        %v657 = vpop.permute.xlu0 %656
        %658 = vrot.lane.b32.xlu0 %v592, 8
        %v659 = vpop.permute.xlu0 %658
        %660 = vrot.lane.b32.xlu0 %v593, 8
        %v661 = vpop.permute.xlu0 %660
        %662 = vrot.lane.b32.xlu0 %v594, 8
        %v663 = vpop.permute.xlu0 %662
        %664 = vrot.lane.b32.xlu0 %v595, 8
        %v665 = vpop.permute.xlu0 %664
        %666 = vrot.lane.b32.xlu0 %v596, 8
        %v667 = vpop.permute.xlu0 %666
        %668 = vrot.lane.b32.xlu0 %v597, 8
        %v669 = vpop.permute.xlu0 %668
        %670 = vrot.lane.b32.xlu0 %v598, 8
        %v671 = vpop.permute.xlu0 %670
        %672 = vrot.lane.b32.xlu0 %v599, 8
        %v673 = vpop.permute.xlu0 %672
        %674 = vrot.lane.b32.xlu0 %v600, 8
        %v675 = vpop.permute.xlu0 %674
        %676 = vrot.lane.b32.xlu0 %v601, 8
        %v677 = vpop.permute.xlu0 %676
        %678 = vrot.lane.b32.xlu0 %v602, 8
        %v679 = vpop.permute.xlu0 %678
        %680 = vrot.lane.b32.xlu0 %v603, 8
        %v681 = vpop.permute.xlu0 %680
        %682 = vrot.lane.b32.xlu0 %v604, 8
        %v683 = vpop.permute.xlu0 %682
        %684 = vrot.lane.b32.xlu0 %v605, 8
        %v685 = vpop.permute.xlu0 %684
        %686 = vrot.lane.b32.xlu0 %v606, 8
        %v687 = vpop.permute.xlu0 %686
        %688 = vrot.lane.b32.xlu0 %v607, 8
        %v689 = vpop.permute.xlu0 %688
        %690 = vrot.lane.b32.xlu0 %v608, 8
        %v691 = vpop.permute.xlu0 %690
        %692 = vrot.lane.b32.xlu0 %v609, 8
        %v693 = vpop.permute.xlu0 %692
        %694 = vrot.lane.b32.xlu0 %v610, 8
        %v695 = vpop.permute.xlu0 %694
        %696 = vrot.lane.b32.xlu0 %v611, 8
        %v697 = vpop.permute.xlu0 %696
        %698 = vrot.lane.b32.xlu0 %v612, 8
        %v699 = vpop.permute.xlu0 %698
        %700 = vrot.lane.b32.xlu0 %v613, 8
        %v701 = vpop.permute.xlu0 %700
        %702 = vrot.lane.b32.xlu0 %v614, 8
        %v703 = vpop.permute.xlu0 %702
        %704 = vrot.lane.b32.xlu0 %v615, 8
        %v705 = vpop.permute.xlu0 %704
        %706 = vrot.lane.b32.xlu0 %v616, 8
        %v707 = vpop.permute.xlu0 %706
        %708 = vrot.lane.b32.xlu0 %v617, 8
        %v709 = vpop.permute.xlu0 %708
        %710 = vrot.lane.b32.xlu0 %v618, 8
        %v711 = vpop.permute.xlu0 %710
        %712 = vrot.lane.b32.xlu0 %v619, 8
        %v713 = vpop.permute.xlu0 %712
        %714 = vrot.lane.b32.xlu0 %v620, 8
        %v715 = vpop.permute.xlu0 %714
        %716 = vrot.lane.b32.xlu0 %v621, 8
        %v717 = vpop.permute.xlu0 %716
        %vm750 = vcmask 97344
        %751 = vst.msk [vmem:[#allocation3] sm:$0xff] %vm750, %v655
        %752 = vst.msk [vmem:[#allocation3 + $0x8] sm:$0xff] %vm750, %v657
        %753 = vst.msk [vmem:[#allocation3 + $0x10] sm:$0xff] %vm750, %v659
        %754 = vst.msk [vmem:[#allocation3 + $0x18] sm:$0xff] %vm750, %v661
        %755 = vst.msk [vmem:[#allocation3 + $0x20] sm:$0xff] %vm750, %v663
        %756 = vst.msk [vmem:[#allocation3 + $0x28] sm:$0xff] %vm750, %v665
        %757 = vst.msk [vmem:[#allocation3 + $0x30] sm:$0xff] %vm750, %v667
        %758 = vst.msk [vmem:[#allocation3 + $0x38] sm:$0xff] %vm750, %v669
        %759 = vst.msk [vmem:[#allocation3 + $0x40] sm:$0xff] %vm750, %v671
        %760 = vst.msk [vmem:[#allocation3 + $0x48] sm:$0xff] %vm750, %v673
        %761 = vst.msk [vmem:[#allocation3 + $0x50] sm:$0xff] %vm750, %v675
        %762 = vst.msk [vmem:[#allocation3 + $0x58] sm:$0xff] %vm750, %v677
        %763 = vst.msk [vmem:[#allocation3 + $0x60] sm:$0xff] %vm750, %v679
        %764 = vst.msk [vmem:[#allocation3 + $0x68] sm:$0xff] %vm750, %v681
        %765 = vst.msk [vmem:[#allocation3 + $0x70] sm:$0xff] %vm750, %v683
        %766 = vst.msk [vmem:[#allocation3 + $0x78] sm:$0xff] %vm750, %v685
        %767 = vst.msk [vmem:[#allocation3 + $0x80] sm:$0xff] %vm750, %v687
        %768 = vst.msk [vmem:[#allocation3 + $0x88] sm:$0xff] %vm750, %v689
        %769 = vst.msk [vmem:[#allocation3 + $0x90] sm:$0xff] %vm750, %v691
        %770 = vst.msk [vmem:[#allocation3 + $0x98] sm:$0xff] %vm750, %v693
        %771 = vst.msk [vmem:[#allocation3 + $0xa0] sm:$0xff] %vm750, %v695
        %772 = vst.msk [vmem:[#allocation3 + $0xa8] sm:$0xff] %vm750, %v697
        %773 = vst.msk [vmem:[#allocation3 + $0xb0] sm:$0xff] %vm750, %v699
        %774 = vst.msk [vmem:[#allocation3 + $0xb8] sm:$0xff] %vm750, %v701
        %775 = vst.msk [vmem:[#allocation3 + $0xc0] sm:$0xff] %vm750, %v703
        %776 = vst.msk [vmem:[#allocation3 + $0xc8] sm:$0xff] %vm750, %v705
        %777 = vst.msk [vmem:[#allocation3 + $0xd0] sm:$0xff] %vm750, %v707
        %778 = vst.msk [vmem:[#allocation3 + $0xd8] sm:$0xff] %vm750, %v709
        %779 = vst.msk [vmem:[#allocation3 + $0xe0] sm:$0xff] %vm750, %v711
        %780 = vst.msk [vmem:[#allocation3 + $0xe8] sm:$0xff] %vm750, %v713
        %781 = vst.msk [vmem:[#allocation3 + $0xf0] sm:$0xff] %vm750, %v715
        %782 = vst.msk [vmem:[#allocation3 + $0xf8] sm:$0xff] %vm750, %v717
        %v783 = vld [vmem:[%s235] sm:$0xff]
        %v784 = vld [vmem:[%s235 + $0x8] sm:$0xff]
        %v785 = vld [vmem:[%s235 + $0x18] sm:$0xff]
        %v786 = vld [vmem:[%s235 + $0x20] sm:$0xff]
        %v787 = vld [vmem:[%s235 + $0x30] sm:$0xff]
        %v788 = vld [vmem:[%s235 + $0x38] sm:$0xff]
        %v789 = vld [vmem:[%s235 + $0x48] sm:$0xff]
        %v790 = vld [vmem:[%s235 + $0x50] sm:$0xff]
        %v791 = vld [vmem:[%s235 + $0x60] sm:$0xff]
        %v792 = vld [vmem:[%s235 + $0x68] sm:$0xff]
        %v793 = vld [vmem:[%s235 + $0x78] sm:$0xff]
        %v794 = vld [vmem:[%s235 + $0x80] sm:$0xff]
        %v795 = vld [vmem:[%s235 + $0x90] sm:$0xff]
        %v796 = vld [vmem:[%s235 + $0x98] sm:$0xff]
        %v797 = vld [vmem:[%s235 + $0xa8] sm:$0xff]
        %v798 = vld [vmem:[%s235 + $0xb0] sm:$0xff]
        %v799 = vld [vmem:[%s235 + $0xc0] sm:$0xff]
        %v800 = vld [vmem:[%s235 + $0xc8] sm:$0xff]
        %v801 = vld [vmem:[%s235 + $0xd8] sm:$0xff]
        %v802 = vld [vmem:[%s235 + $0xe0] sm:$0xff]
        %v803 = vld [vmem:[%s235 + $0xf0] sm:$0xff]
        %v804 = vld [vmem:[%s235 + $0xf8] sm:$0xff]
        %v805 = vld [vmem:[%s235 + $0x108] sm:$0xff]
        %v806 = vld [vmem:[%s235 + $0x110] sm:$0xff]
        %v807 = vld [vmem:[%s235 + $0x120] sm:$0xff]
        %v808 = vld [vmem:[%s235 + $0x128] sm:$0xff]
        %v809 = vld [vmem:[%s235 + $0x138] sm:$0xff]
        %v810 = vld [vmem:[%s235 + $0x140] sm:$0xff]
        %v811 = vld [vmem:[%s235 + $0x150] sm:$0xff]
        %v812 = vld [vmem:[%s235 + $0x158] sm:$0xff]
        %v813 = vld [vmem:[%s235 + $0x168] sm:$0xff]
        %v814 = vld [vmem:[%s235 + $0x170] sm:$0xff]
        %847 = vrot.lane.b32.xlu0 %v783, 12
        %v848 = vpop.permute.xlu0 %847
        %849 = vrot.lane.b32.xlu0 %v784, 12
        %v850 = vpop.permute.xlu0 %849
        %851 = vrot.lane.b32.xlu0 %v785, 12
        %v852 = vpop.permute.xlu0 %851
        %853 = vrot.lane.b32.xlu0 %v786, 12
        %v854 = vpop.permute.xlu0 %853
        %855 = vrot.lane.b32.xlu0 %v787, 12
        %v856 = vpop.permute.xlu0 %855
        %857 = vrot.lane.b32.xlu0 %v788, 12
        %v858 = vpop.permute.xlu0 %857
        %859 = vrot.lane.b32.xlu0 %v789, 12
        %v860 = vpop.permute.xlu0 %859
        %861 = vrot.lane.b32.xlu0 %v790, 12
        %v862 = vpop.permute.xlu0 %861
        %863 = vrot.lane.b32.xlu0 %v791, 12
        %v864 = vpop.permute.xlu0 %863
        %865 = vrot.lane.b32.xlu0 %v792, 12
        %v866 = vpop.permute.xlu0 %865
        %867 = vrot.lane.b32.xlu0 %v793, 12
        %v868 = vpop.permute.xlu0 %867
        %869 = vrot.lane.b32.xlu0 %v794, 12
        %v870 = vpop.permute.xlu0 %869
        %871 = vrot.lane.b32.xlu0 %v795, 12
        %v872 = vpop.permute.xlu0 %871
        %873 = vrot.lane.b32.xlu0 %v796, 12
        %v874 = vpop.permute.xlu0 %873
        %875 = vrot.lane.b32.xlu0 %v797, 12
        %v876 = vpop.permute.xlu0 %875
        %877 = vrot.lane.b32.xlu0 %v798, 12
        %v878 = vpop.permute.xlu0 %877
        %879 = vrot.lane.b32.xlu0 %v799, 12
        %v880 = vpop.permute.xlu0 %879
        %881 = vrot.lane.b32.xlu0 %v800, 12
        %v882 = vpop.permute.xlu0 %881
        %883 = vrot.lane.b32.xlu0 %v801, 12
        %v884 = vpop.permute.xlu0 %883
        %885 = vrot.lane.b32.xlu0 %v802, 12
        %v886 = vpop.permute.xlu0 %885
        %887 = vrot.lane.b32.xlu0 %v803, 12
        %v888 = vpop.permute.xlu0 %887
        %889 = vrot.lane.b32.xlu0 %v804, 12
        %v890 = vpop.permute.xlu0 %889
        %891 = vrot.lane.b32.xlu0 %v805, 12
        %v892 = vpop.permute.xlu0 %891
        %893 = vrot.lane.b32.xlu0 %v806, 12
        %v894 = vpop.permute.xlu0 %893
        %895 = vrot.lane.b32.xlu0 %v807, 12
        %v896 = vpop.permute.xlu0 %895
        %897 = vrot.lane.b32.xlu0 %v808, 12
        %v898 = vpop.permute.xlu0 %897
        %899 = vrot.lane.b32.xlu0 %v809, 12
        %v900 = vpop.permute.xlu0 %899
        %901 = vrot.lane.b32.xlu0 %v810, 12
        %v902 = vpop.permute.xlu0 %901
        %903 = vrot.lane.b32.xlu0 %v811, 12
        %v904 = vpop.permute.xlu0 %903
        %905 = vrot.lane.b32.xlu0 %v812, 12
        %v906 = vpop.permute.xlu0 %905
        %907 = vrot.lane.b32.xlu0 %v813, 12
        %v908 = vpop.permute.xlu0 %907
        %909 = vrot.lane.b32.xlu0 %v814, 12
        %v910 = vpop.permute.xlu0 %909
        %vm943 = vcmask 130144
        %944 = vst.msk [vmem:[#allocation3] sm:$0xff] %vm943, %v848
        %945 = vst.msk [vmem:[#allocation3 + $0x8] sm:$0xff] %vm943, %v850
        %946 = vst.msk [vmem:[#allocation3 + $0x10] sm:$0xff] %vm943, %v852
        %947 = vst.msk [vmem:[#allocation3 + $0x18] sm:$0xff] %vm943, %v854
        %948 = vst.msk [vmem:[#allocation3 + $0x20] sm:$0xff] %vm943, %v856
        %949 = vst.msk [vmem:[#allocation3 + $0x28] sm:$0xff] %vm943, %v858
        %950 = vst.msk [vmem:[#allocation3 + $0x30] sm:$0xff] %vm943, %v860
        %951 = vst.msk [vmem:[#allocation3 + $0x38] sm:$0xff] %vm943, %v862
        %952 = vst.msk [vmem:[#allocation3 + $0x40] sm:$0xff] %vm943, %v864
        %953 = vst.msk [vmem:[#allocation3 + $0x48] sm:$0xff] %vm943, %v866
        %954 = vst.msk [vmem:[#allocation3 + $0x50] sm:$0xff] %vm943, %v868
        %955 = vst.msk [vmem:[#allocation3 + $0x58] sm:$0xff] %vm943, %v870
        %956 = vst.msk [vmem:[#allocation3 + $0x60] sm:$0xff] %vm943, %v872
        %957 = vst.msk [vmem:[#allocation3 + $0x68] sm:$0xff] %vm943, %v874
        %958 = vst.msk [vmem:[#allocation3 + $0x70] sm:$0xff] %vm943, %v876
        %959 = vst.msk [vmem:[#allocation3 + $0x78] sm:$0xff] %vm943, %v878
        %960 = vst.msk [vmem:[#allocation3 + $0x80] sm:$0xff] %vm943, %v880
        %961 = vst.msk [vmem:[#allocation3 + $0x88] sm:$0xff] %vm943, %v882
        %962 = vst.msk [vmem:[#allocation3 + $0x90] sm:$0xff] %vm943, %v884
        %963 = vst.msk [vmem:[#allocation3 + $0x98] sm:$0xff] %vm943, %v886
        %964 = vst.msk [vmem:[#allocation3 + $0xa0] sm:$0xff] %vm943, %v888
        %965 = vst.msk [vmem:[#allocation3 + $0xa8] sm:$0xff] %vm943, %v890
        %966 = vst.msk [vmem:[#allocation3 + $0xb0] sm:$0xff] %vm943, %v892
        %967 = vst.msk [vmem:[#allocation3 + $0xb8] sm:$0xff] %vm943, %v894
        %968 = vst.msk [vmem:[#allocation3 + $0xc0] sm:$0xff] %vm943, %v896
        %969 = vst.msk [vmem:[#allocation3 + $0xc8] sm:$0xff] %vm943, %v898
        %970 = vst.msk [vmem:[#allocation3 + $0xd0] sm:$0xff] %vm943, %v900
        %971 = vst.msk [vmem:[#allocation3 + $0xd8] sm:$0xff] %vm943, %v902
        %972 = vst.msk [vmem:[#allocation3 + $0xe0] sm:$0xff] %vm943, %v904
        %973 = vst.msk [vmem:[#allocation3 + $0xe8] sm:$0xff] %vm943, %v906
        %974 = vst.msk [vmem:[#allocation3 + $0xf0] sm:$0xff] %vm943, %v908
        %975 = vst.msk [vmem:[#allocation3 + $0xf8] sm:$0xff] %vm943, %v910
        %v976 = vld [vmem:[%s235 + $0x1] sm:$0xff]
        %v977 = vld [vmem:[%s235 + $0x9] sm:$0xff]
        %v978 = vld [vmem:[%s235 + $0x19] sm:$0xff]
        %v979 = vld [vmem:[%s235 + $0x21] sm:$0xff]
        %v980 = vld [vmem:[%s235 + $0x31] sm:$0xff]
        %v981 = vld [vmem:[%s235 + $0x39] sm:$0xff]
        %v982 = vld [vmem:[%s235 + $0x49] sm:$0xff]
        %v983 = vld [vmem:[%s235 + $0x51] sm:$0xff]
        %v984 = vld [vmem:[%s235 + $0x61] sm:$0xff]
        %v985 = vld [vmem:[%s235 + $0x69] sm:$0xff]
        %v986 = vld [vmem:[%s235 + $0x79] sm:$0xff]
        %v987 = vld [vmem:[%s235 + $0x81] sm:$0xff]
        %v988 = vld [vmem:[%s235 + $0x91] sm:$0xff]
        %v989 = vld [vmem:[%s235 + $0x99] sm:$0xff]
        %v990 = vld [vmem:[%s235 + $0xa9] sm:$0xff]
        %v991 = vld [vmem:[%s235 + $0xb1] sm:$0xff]
        %v992 = vld [vmem:[%s235 + $0xc1] sm:$0xff]
        %v993 = vld [vmem:[%s235 + $0xc9] sm:$0xff]
        %v994 = vld [vmem:[%s235 + $0xd9] sm:$0xff]
        %v995 = vld [vmem:[%s235 + $0xe1] sm:$0xff]
        %v996 = vld [vmem:[%s235 + $0xf1] sm:$0xff]
        %v997 = vld [vmem:[%s235 + $0xf9] sm:$0xff]
        %v998 = vld [vmem:[%s235 + $0x109] sm:$0xff]
        %v999 = vld [vmem:[%s235 + $0x111] sm:$0xff]
        %v1000 = vld [vmem:[%s235 + $0x121] sm:$0xff]
        %v1001 = vld [vmem:[%s235 + $0x129] sm:$0xff]
        %v1002 = vld [vmem:[%s235 + $0x139] sm:$0xff]
        %v1003 = vld [vmem:[%s235 + $0x141] sm:$0xff]
        %v1004 = vld [vmem:[%s235 + $0x151] sm:$0xff]
        %v1005 = vld [vmem:[%s235 + $0x159] sm:$0xff]
        %v1006 = vld [vmem:[%s235 + $0x169] sm:$0xff]
        %v1007 = vld [vmem:[%s235 + $0x171] sm:$0xff]
        %1040 = vrot.lane.b32.xlu0 %v976, 16
        %v1041 = vpop.permute.xlu0 %1040
        %1042 = vrot.lane.b32.xlu0 %v977, 16
        %v1043 = vpop.permute.xlu0 %1042
        %1044 = vrot.lane.b32.xlu0 %v978, 16
        %v1045 = vpop.permute.xlu0 %1044
        %1046 = vrot.lane.b32.xlu0 %v979, 16
        %v1047 = vpop.permute.xlu0 %1046
        %1048 = vrot.lane.b32.xlu0 %v980, 16
        %v1049 = vpop.permute.xlu0 %1048
        %1050 = vrot.lane.b32.xlu0 %v981, 16
        %v1051 = vpop.permute.xlu0 %1050
        %1052 = vrot.lane.b32.xlu0 %v982, 16
        %v1053 = vpop.permute.xlu0 %1052
        %1054 = vrot.lane.b32.xlu0 %v983, 16
        %v1055 = vpop.permute.xlu0 %1054
        %1056 = vrot.lane.b32.xlu0 %v984, 16
        %v1057 = vpop.permute.xlu0 %1056
        %1058 = vrot.lane.b32.xlu0 %v985, 16
        %v1059 = vpop.permute.xlu0 %1058
        %1060 = vrot.lane.b32.xlu0 %v986, 16
        %v1061 = vpop.permute.xlu0 %1060
        %1062 = vrot.lane.b32.xlu0 %v987, 16
        %v1063 = vpop.permute.xlu0 %1062
        %1064 = vrot.lane.b32.xlu0 %v988, 16
        %v1065 = vpop.permute.xlu0 %1064
        %1066 = vrot.lane.b32.xlu0 %v989, 16
        %v1067 = vpop.permute.xlu0 %1066
        %1068 = vrot.lane.b32.xlu0 %v990, 16
        %v1069 = vpop.permute.xlu0 %1068
        %1070 = vrot.lane.b32.xlu0 %v991, 16
        %v1071 = vpop.permute.xlu0 %1070
        %1072 = vrot.lane.b32.xlu0 %v992, 16
        %v1073 = vpop.permute.xlu0 %1072
        %1074 = vrot.lane.b32.xlu0 %v993, 16
        %v1075 = vpop.permute.xlu0 %1074
        %1076 = vrot.lane.b32.xlu0 %v994, 16
        %v1077 = vpop.permute.xlu0 %1076
        %1078 = vrot.lane.b32.xlu0 %v995, 16
        %v1079 = vpop.permute.xlu0 %1078
        %1080 = vrot.lane.b32.xlu0 %v996, 16
        %v1081 = vpop.permute.xlu0 %1080
        %1082 = vrot.lane.b32.xlu0 %v997, 16
        %v1083 = vpop.permute.xlu0 %1082
        %1084 = vrot.lane.b32.xlu0 %v998, 16
        %v1085 = vpop.permute.xlu0 %1084
        %1086 = vrot.lane.b32.xlu0 %v999, 16
        %v1087 = vpop.permute.xlu0 %1086
        %1088 = vrot.lane.b32.xlu0 %v1000, 16
        %v1089 = vpop.permute.xlu0 %1088
        %1090 = vrot.lane.b32.xlu0 %v1001, 16
        %v1091 = vpop.permute.xlu0 %1090
        %1092 = vrot.lane.b32.xlu0 %v1002, 16
        %v1093 = vpop.permute.xlu0 %1092
        %1094 = vrot.lane.b32.xlu0 %v1003, 16
        %v1095 = vpop.permute.xlu0 %1094
        %1096 = vrot.lane.b32.xlu0 %v1004, 16
        %v1097 = vpop.permute.xlu0 %1096
        %1098 = vrot.lane.b32.xlu0 %v1005, 16
        %v1099 = vpop.permute.xlu0 %1098
        %1100 = vrot.lane.b32.xlu0 %v1006, 16
        %v1101 = vpop.permute.xlu0 %1100
        %1102 = vrot.lane.b32.xlu0 %v1007, 16
        %v1103 = vpop.permute.xlu0 %1102
        %vm1136 = vcmask 162944
        %1137 = vst.msk [vmem:[#allocation3] sm:$0xff] %vm1136, %v1041
        %1138 = vst.msk [vmem:[#allocation3 + $0x8] sm:$0xff] %vm1136, %v1043
        %1139 = vst.msk [vmem:[#allocation3 + $0x10] sm:$0xff] %vm1136, %v1045
        %1140 = vst.msk [vmem:[#allocation3 + $0x18] sm:$0xff] %vm1136, %v1047
        %1141 = vst.msk [vmem:[#allocation3 + $0x20] sm:$0xff] %vm1136, %v1049
        %1142 = vst.msk [vmem:[#allocation3 + $0x28] sm:$0xff] %vm1136, %v1051
        %1143 = vst.msk [vmem:[#allocation3 + $0x30] sm:$0xff] %vm1136, %v1053
        %1144 = vst.msk [vmem:[#allocation3 + $0x38] sm:$0xff] %vm1136, %v1055
        %1145 = vst.msk [vmem:[#allocation3 + $0x40] sm:$0xff] %vm1136, %v1057
        %1146 = vst.msk [vmem:[#allocation3 + $0x48] sm:$0xff] %vm1136, %v1059
        %1147 = vst.msk [vmem:[#allocation3 + $0x50] sm:$0xff] %vm1136, %v1061
        %1148 = vst.msk [vmem:[#allocation3 + $0x58] sm:$0xff] %vm1136, %v1063
        %1149 = vst.msk [vmem:[#allocation3 + $0x60] sm:$0xff] %vm1136, %v1065
        %1150 = vst.msk [vmem:[#allocation3 + $0x68] sm:$0xff] %vm1136, %v1067
        %1151 = vst.msk [vmem:[#allocation3 + $0x70] sm:$0xff] %vm1136, %v1069
        %1152 = vst.msk [vmem:[#allocation3 + $0x78] sm:$0xff] %vm1136, %v1071
        %1153 = vst.msk [vmem:[#allocation3 + $0x80] sm:$0xff] %vm1136, %v1073
        %1154 = vst.msk [vmem:[#allocation3 + $0x88] sm:$0xff] %vm1136, %v1075
        %1155 = vst.msk [vmem:[#allocation3 + $0x90] sm:$0xff] %vm1136, %v1077
        %1156 = vst.msk [vmem:[#allocation3 + $0x98] sm:$0xff] %vm1136, %v1079
        %1157 = vst.msk [vmem:[#allocation3 + $0xa0] sm:$0xff] %vm1136, %v1081
        %1158 = vst.msk [vmem:[#allocation3 + $0xa8] sm:$0xff] %vm1136, %v1083
        %1159 = vst.msk [vmem:[#allocation3 + $0xb0] sm:$0xff] %vm1136, %v1085
        %1160 = vst.msk [vmem:[#allocation3 + $0xb8] sm:$0xff] %vm1136, %v1087
        %1161 = vst.msk [vmem:[#allocation3 + $0xc0] sm:$0xff] %vm1136, %v1089
        %1162 = vst.msk [vmem:[#allocation3 + $0xc8] sm:$0xff] %vm1136, %v1091
        %1163 = vst.msk [vmem:[#allocation3 + $0xd0] sm:$0xff] %vm1136, %v1093
        %1164 = vst.msk [vmem:[#allocation3 + $0xd8] sm:$0xff] %vm1136, %v1095
        %1165 = vst.msk [vmem:[#allocation3 + $0xe0] sm:$0xff] %vm1136, %v1097
        %1166 = vst.msk [vmem:[#allocation3 + $0xe8] sm:$0xff] %vm1136, %v1099
        %1167 = vst.msk [vmem:[#allocation3 + $0xf0] sm:$0xff] %vm1136, %v1101
        %1168 = vst.msk [vmem:[#allocation3 + $0xf8] sm:$0xff] %vm1136, %v1103
        %v1169 = vld [vmem:[%s235 + $0x2] sm:$0xff]
        %v1170 = vld [vmem:[%s235 + $0xa] sm:$0xff]
        %v1171 = vld [vmem:[%s235 + $0x1a] sm:$0xff]
        %v1172 = vld [vmem:[%s235 + $0x22] sm:$0xff]
        %v1173 = vld [vmem:[%s235 + $0x32] sm:$0xff]
        %v1174 = vld [vmem:[%s235 + $0x3a] sm:$0xff]
        %v1175 = vld [vmem:[%s235 + $0x4a] sm:$0xff]
        %v1176 = vld [vmem:[%s235 + $0x52] sm:$0xff]
        %v1177 = vld [vmem:[%s235 + $0x62] sm:$0xff]
        %v1178 = vld [vmem:[%s235 + $0x6a] sm:$0xff]
        %v1179 = vld [vmem:[%s235 + $0x7a] sm:$0xff]
        %v1180 = vld [vmem:[%s235 + $0x82] sm:$0xff]
        %v1181 = vld [vmem:[%s235 + $0x92] sm:$0xff]
        %v1182 = vld [vmem:[%s235 + $0x9a] sm:$0xff]
        %v1183 = vld [vmem:[%s235 + $0xaa] sm:$0xff]
        %v1184 = vld [vmem:[%s235 + $0xb2] sm:$0xff]
        %v1185 = vld [vmem:[%s235 + $0xc2] sm:$0xff]
        %v1186 = vld [vmem:[%s235 + $0xca] sm:$0xff]
        %v1187 = vld [vmem:[%s235 + $0xda] sm:$0xff]
        %v1188 = vld [vmem:[%s235 + $0xe2] sm:$0xff]
        %v1189 = vld [vmem:[%s235 + $0xf2] sm:$0xff]
        %v1190 = vld [vmem:[%s235 + $0xfa] sm:$0xff]
        %v1191 = vld [vmem:[%s235 + $0x10a] sm:$0xff]
        %v1192 = vld [vmem:[%s235 + $0x112] sm:$0xff]
        %v1193 = vld [vmem:[%s235 + $0x122] sm:$0xff]
        %v1194 = vld [vmem:[%s235 + $0x12a] sm:$0xff]
        %v1195 = vld [vmem:[%s235 + $0x13a] sm:$0xff]
        %v1196 = vld [vmem:[%s235 + $0x142] sm:$0xff]
        %v1197 = vld [vmem:[%s235 + $0x152] sm:$0xff]
        %v1198 = vld [vmem:[%s235 + $0x15a] sm:$0xff]
        %v1199 = vld [vmem:[%s235 + $0x16a] sm:$0xff]
        %v1200 = vld [vmem:[%s235 + $0x172] sm:$0xff]
        %1233 = vrot.lane.b32.xlu0 %v1169, 20
        %v1234 = vpop.permute.xlu0 %1233
        %1235 = vrot.lane.b32.xlu0 %v1170, 20
        %v1236 = vpop.permute.xlu0 %1235
        %1237 = vrot.lane.b32.xlu0 %v1171, 20
        %v1238 = vpop.permute.xlu0 %1237
        %1239 = vrot.lane.b32.xlu0 %v1172, 20
        %v1240 = vpop.permute.xlu0 %1239
        %1241 = vrot.lane.b32.xlu0 %v1173, 20
        %v1242 = vpop.permute.xlu0 %1241
        %1243 = vrot.lane.b32.xlu0 %v1174, 20
        %v1244 = vpop.permute.xlu0 %1243
        %1245 = vrot.lane.b32.xlu0 %v1175, 20
        %v1246 = vpop.permute.xlu0 %1245
        %1247 = vrot.lane.b32.xlu0 %v1176, 20
        %v1248 = vpop.permute.xlu0 %1247
        %1249 = vrot.lane.b32.xlu0 %v1177, 20
        %v1250 = vpop.permute.xlu0 %1249
        %1251 = vrot.lane.b32.xlu0 %v1178, 20
        %v1252 = vpop.permute.xlu0 %1251
        %1253 = vrot.lane.b32.xlu0 %v1179, 20
        %v1254 = vpop.permute.xlu0 %1253
        %1255 = vrot.lane.b32.xlu0 %v1180, 20
        %v1256 = vpop.permute.xlu0 %1255
        %1257 = vrot.lane.b32.xlu0 %v1181, 20
        %v1258 = vpop.permute.xlu0 %1257
        %1259 = vrot.lane.b32.xlu0 %v1182, 20
        %v1260 = vpop.permute.xlu0 %1259
        %1261 = vrot.lane.b32.xlu0 %v1183, 20
        %v1262 = vpop.permute.xlu0 %1261
        %1263 = vrot.lane.b32.xlu0 %v1184, 20
        %v1264 = vpop.permute.xlu0 %1263
        %1265 = vrot.lane.b32.xlu0 %v1185, 20
        %v1266 = vpop.permute.xlu0 %1265
        %1267 = vrot.lane.b32.xlu0 %v1186, 20
        %v1268 = vpop.permute.xlu0 %1267
        %1269 = vrot.lane.b32.xlu0 %v1187, 20
        %v1270 = vpop.permute.xlu0 %1269
        %1271 = vrot.lane.b32.xlu0 %v1188, 20
        %v1272 = vpop.permute.xlu0 %1271
        %1273 = vrot.lane.b32.xlu0 %v1189, 20
        %v1274 = vpop.permute.xlu0 %1273
        %1275 = vrot.lane.b32.xlu0 %v1190, 20
        %v1276 = vpop.permute.xlu0 %1275
        %1277 = vrot.lane.b32.xlu0 %v1191, 20
        %v1278 = vpop.permute.xlu0 %1277
        %1279 = vrot.lane.b32.xlu0 %v1192, 20
        %v1280 = vpop.permute.xlu0 %1279
        %1281 = vrot.lane.b32.xlu0 %v1193, 20
        %v1282 = vpop.permute.xlu0 %1281
        %1283 = vrot.lane.b32.xlu0 %v1194, 20
        %v1284 = vpop.permute.xlu0 %1283
        %1285 = vrot.lane.b32.xlu0 %v1195, 20
        %v1286 = vpop.permute.xlu0 %1285
        %1287 = vrot.lane.b32.xlu0 %v1196, 20
        %v1288 = vpop.permute.xlu0 %1287
        %1289 = vrot.lane.b32.xlu0 %v1197, 20
        %v1290 = vpop.permute.xlu0 %1289
        %1291 = vrot.lane.b32.xlu0 %v1198, 20
        %v1292 = vpop.permute.xlu0 %1291
        %1293 = vrot.lane.b32.xlu0 %v1199, 20
        %v1294 = vpop.permute.xlu0 %1293
        %1295 = vrot.lane.b32.xlu0 %v1200, 20
        %v1296 = vpop.permute.xlu0 %1295
        %vm1329 = vcmask 195744
        %1330 = vst.msk [vmem:[#allocation3] sm:$0xff] %vm1329, %v1234
        %1331 = vst.msk [vmem:[#allocation3 + $0x8] sm:$0xff] %vm1329, %v1236
        %1332 = vst.msk [vmem:[#allocation3 + $0x10] sm:$0xff] %vm1329, %v1238
        %1333 = vst.msk [vmem:[#allocation3 + $0x18] sm:$0xff] %vm1329, %v1240
        %1334 = vst.msk [vmem:[#allocation3 + $0x20] sm:$0xff] %vm1329, %v1242
        %1335 = vst.msk [vmem:[#allocation3 + $0x28] sm:$0xff] %vm1329, %v1244
        %1336 = vst.msk [vmem:[#allocation3 + $0x30] sm:$0xff] %vm1329, %v1246
        %1337 = vst.msk [vmem:[#allocation3 + $0x38] sm:$0xff] %vm1329, %v1248
        %1338 = vst.msk [vmem:[#allocation3 + $0x40] sm:$0xff] %vm1329, %v1250
        %1339 = vst.msk [vmem:[#allocation3 + $0x48] sm:$0xff] %vm1329, %v1252
        %1340 = vst.msk [vmem:[#allocation3 + $0x50] sm:$0xff] %vm1329, %v1254
        %1341 = vst.msk [vmem:[#allocation3 + $0x58] sm:$0xff] %vm1329, %v1256
        %1342 = vst.msk [vmem:[#allocation3 + $0x60] sm:$0xff] %vm1329, %v1258
        %1343 = vst.msk [vmem:[#allocation3 + $0x68] sm:$0xff] %vm1329, %v1260
        %1344 = vst.msk [vmem:[#allocation3 + $0x70] sm:$0xff] %vm1329, %v1262
        %1345 = vst.msk [vmem:[#allocation3 + $0x78] sm:$0xff] %vm1329, %v1264
        %1346 = vst.msk [vmem:[#allocation3 + $0x80] sm:$0xff] %vm1329, %v1266
        %1347 = vst.msk [vmem:[#allocation3 + $0x88] sm:$0xff] %vm1329, %v1268
        %1348 = vst.msk [vmem:[#allocation3 + $0x90] sm:$0xff] %vm1329, %v1270
        %1349 = vst.msk [vmem:[#allocation3 + $0x98] sm:$0xff] %vm1329, %v1272
        %1350 = vst.msk [vmem:[#allocation3 + $0xa0] sm:$0xff] %vm1329, %v1274
        %1351 = vst.msk [vmem:[#allocation3 + $0xa8] sm:$0xff] %vm1329, %v1276
        %1352 = vst.msk [vmem:[#allocation3 + $0xb0] sm:$0xff] %vm1329, %v1278
        %1353 = vst.msk [vmem:[#allocation3 + $0xb8] sm:$0xff] %vm1329, %v1280
        %1354 = vst.msk [vmem:[#allocation3 + $0xc0] sm:$0xff] %vm1329, %v1282
        %1355 = vst.msk [vmem:[#allocation3 + $0xc8] sm:$0xff] %vm1329, %v1284
        %1356 = vst.msk [vmem:[#allocation3 + $0xd0] sm:$0xff] %vm1329, %v1286
        %1357 = vst.msk [vmem:[#allocation3 + $0xd8] sm:$0xff] %vm1329, %v1288
        %1358 = vst.msk [vmem:[#allocation3 + $0xe0] sm:$0xff] %vm1329, %v1290
        %1359 = vst.msk [vmem:[#allocation3 + $0xe8] sm:$0xff] %vm1329, %v1292
        %1360 = vst.msk [vmem:[#allocation3 + $0xf0] sm:$0xff] %vm1329, %v1294
        %1361 = vst.msk [vmem:[#allocation3 + $0xf8] sm:$0xff] %vm1329, %v1296
        %s1362 = scalar_lea.vmem [#allocation2], 48
        %v1363 = vld [vmem:[%s1362] sm:$0xff]
        %v1364 = vld [vmem:[%s1362 + $0x8] sm:$0xff]
        %v1365 = vld [vmem:[%s1362 + $0x18] sm:$0xff]
        %v1366 = vld [vmem:[%s1362 + $0x20] sm:$0xff]
        %v1367 = vld [vmem:[%s1362 + $0x30] sm:$0xff]
        %v1368 = vld [vmem:[%s1362 + $0x38] sm:$0xff]
        %v1369 = vld [vmem:[%s1362 + $0x48] sm:$0xff]
        %v1370 = vld [vmem:[%s1362 + $0x50] sm:$0xff]
        %v1371 = vld [vmem:[%s1362 + $0x60] sm:$0xff]
        %v1372 = vld [vmem:[%s1362 + $0x68] sm:$0xff]
        %v1373 = vld [vmem:[%s1362 + $0x78] sm:$0xff]
        %v1374 = vld [vmem:[%s1362 + $0x80] sm:$0xff]
        %v1375 = vld [vmem:[%s1362 + $0x90] sm:$0xff]
        %v1376 = vld [vmem:[%s1362 + $0x98] sm:$0xff]
        %v1377 = vld [vmem:[%s1362 + $0xa8] sm:$0xff]
        %v1378 = vld [vmem:[%s1362 + $0xb0] sm:$0xff]
        %v1379 = vld [vmem:[%s1362 + $0xc0] sm:$0xff]
        %v1380 = vld [vmem:[%s1362 + $0xc8] sm:$0xff]
        %v1381 = vld [vmem:[%s1362 + $0xd8] sm:$0xff]
        %v1382 = vld [vmem:[%s1362 + $0xe0] sm:$0xff]
        %v1383 = vld [vmem:[%s1362 + $0xf0] sm:$0xff]
        %v1384 = vld [vmem:[%s1362 + $0xf8] sm:$0xff]
        %v1385 = vld [vmem:[%s1362 + $0x108] sm:$0xff]
        %v1386 = vld [vmem:[%s1362 + $0x110] sm:$0xff]
        %v1387 = vld [vmem:[%s1362 + $0x120] sm:$0xff]
        %v1388 = vld [vmem:[%s1362 + $0x128] sm:$0xff]
        %v1389 = vld [vmem:[%s1362 + $0x138] sm:$0xff]
        %v1390 = vld [vmem:[%s1362 + $0x140] sm:$0xff]
        %v1391 = vld [vmem:[%s1362 + $0x150] sm:$0xff]
        %v1392 = vld [vmem:[%s1362 + $0x158] sm:$0xff]
        %v1393 = vld [vmem:[%s1362 + $0x168] sm:$0xff]
        %v1394 = vld [vmem:[%s1362 + $0x170] sm:$0xff]
        %1427 = vrot.lane.b32.xlu0 %v1363, 24
        %v1428 = vpop.permute.xlu0 %1427
        %1429 = vrot.lane.b32.xlu0 %v1364, 24
        %v1430 = vpop.permute.xlu0 %1429
        %1431 = vrot.lane.b32.xlu0 %v1365, 24
        %v1432 = vpop.permute.xlu0 %1431
        %1433 = vrot.lane.b32.xlu0 %v1366, 24
        %v1434 = vpop.permute.xlu0 %1433
        %1435 = vrot.lane.b32.xlu0 %v1367, 24
        %v1436 = vpop.permute.xlu0 %1435
        %1437 = vrot.lane.b32.xlu0 %v1368, 24
        %v1438 = vpop.permute.xlu0 %1437
        %1439 = vrot.lane.b32.xlu0 %v1369, 24
        %v1440 = vpop.permute.xlu0 %1439
        %1441 = vrot.lane.b32.xlu0 %v1370, 24
        %v1442 = vpop.permute.xlu0 %1441
        %1443 = vrot.lane.b32.xlu0 %v1371, 24
        %v1444 = vpop.permute.xlu0 %1443
        %1445 = vrot.lane.b32.xlu0 %v1372, 24
        %v1446 = vpop.permute.xlu0 %1445
        %1447 = vrot.lane.b32.xlu0 %v1373, 24
        %v1448 = vpop.permute.xlu0 %1447
        %1449 = vrot.lane.b32.xlu0 %v1374, 24
        %v1450 = vpop.permute.xlu0 %1449
        %1451 = vrot.lane.b32.xlu0 %v1375, 24
        %v1452 = vpop.permute.xlu0 %1451
        %1453 = vrot.lane.b32.xlu0 %v1376, 24
        %v1454 = vpop.permute.xlu0 %1453
        %1455 = vrot.lane.b32.xlu0 %v1377, 24
        %v1456 = vpop.permute.xlu0 %1455
        %1457 = vrot.lane.b32.xlu0 %v1378, 24
        %v1458 = vpop.permute.xlu0 %1457
        %1459 = vrot.lane.b32.xlu0 %v1379, 24
        %v1460 = vpop.permute.xlu0 %1459
        %1461 = vrot.lane.b32.xlu0 %v1380, 24
        %v1462 = vpop.permute.xlu0 %1461
        %1463 = vrot.lane.b32.xlu0 %v1381, 24
        %v1464 = vpop.permute.xlu0 %1463
        %1465 = vrot.lane.b32.xlu0 %v1382, 24
        %v1466 = vpop.permute.xlu0 %1465
        %1467 = vrot.lane.b32.xlu0 %v1383, 24
        %v1468 = vpop.permute.xlu0 %1467
        %1469 = vrot.lane.b32.xlu0 %v1384, 24
        %v1470 = vpop.permute.xlu0 %1469
        %1471 = vrot.lane.b32.xlu0 %v1385, 24
        %v1472 = vpop.permute.xlu0 %1471
        %1473 = vrot.lane.b32.xlu0 %v1386, 24
        %v1474 = vpop.permute.xlu0 %1473
        %1475 = vrot.lane.b32.xlu0 %v1387, 24
        %v1476 = vpop.permute.xlu0 %1475
        %1477 = vrot.lane.b32.xlu0 %v1388, 24
        %v1478 = vpop.permute.xlu0 %1477
        %1479 = vrot.lane.b32.xlu0 %v1389, 24
        %v1480 = vpop.permute.xlu0 %1479
        %1481 = vrot.lane.b32.xlu0 %v1390, 24
        %v1482 = vpop.permute.xlu0 %1481
        %1483 = vrot.lane.b32.xlu0 %v1391, 24
        %v1484 = vpop.permute.xlu0 %1483
        %1485 = vrot.lane.b32.xlu0 %v1392, 24
        %v1486 = vpop.permute.xlu0 %1485
        %1487 = vrot.lane.b32.xlu0 %v1393, 24
        %v1488 = vpop.permute.xlu0 %1487
        %1489 = vrot.lane.b32.xlu0 %v1394, 24
        %v1490 = vpop.permute.xlu0 %1489
        %vm1523 = vcmask 228544
        %1524 = vst.msk [vmem:[#allocation3] sm:$0xff] %vm1523, %v1428
        %1525 = vst.msk [vmem:[#allocation3 + $0x8] sm:$0xff] %vm1523, %v1430
        %1526 = vst.msk [vmem:[#allocation3 + $0x10] sm:$0xff] %vm1523, %v1432
        %1527 = vst.msk [vmem:[#allocation3 + $0x18] sm:$0xff] %vm1523, %v1434
        %1528 = vst.msk [vmem:[#allocation3 + $0x20] sm:$0xff] %vm1523, %v1436
        %1529 = vst.msk [vmem:[#allocation3 + $0x28] sm:$0xff] %vm1523, %v1438
        %1530 = vst.msk [vmem:[#allocation3 + $0x30] sm:$0xff] %vm1523, %v1440
        %1531 = vst.msk [vmem:[#allocation3 + $0x38] sm:$0xff] %vm1523, %v1442
        %1532 = vst.msk [vmem:[#allocation3 + $0x40] sm:$0xff] %vm1523, %v1444
        %1533 = vst.msk [vmem:[#allocation3 + $0x48] sm:$0xff] %vm1523, %v1446
        %1534 = vst.msk [vmem:[#allocation3 + $0x50] sm:$0xff] %vm1523, %v1448
        %1535 = vst.msk [vmem:[#allocation3 + $0x58] sm:$0xff] %vm1523, %v1450
        %1536 = vst.msk [vmem:[#allocation3 + $0x60] sm:$0xff] %vm1523, %v1452
        %1537 = vst.msk [vmem:[#allocation3 + $0x68] sm:$0xff] %vm1523, %v1454
        %1538 = vst.msk [vmem:[#allocation3 + $0x70] sm:$0xff] %vm1523, %v1456
        %1539 = vst.msk [vmem:[#allocation3 + $0x78] sm:$0xff] %vm1523, %v1458
        %1540 = vst.msk [vmem:[#allocation3 + $0x80] sm:$0xff] %vm1523, %v1460
        %1541 = vst.msk [vmem:[#allocation3 + $0x88] sm:$0xff] %vm1523, %v1462
        %1542 = vst.msk [vmem:[#allocation3 + $0x90] sm:$0xff] %vm1523, %v1464
        %1543 = vst.msk [vmem:[#allocation3 + $0x98] sm:$0xff] %vm1523, %v1466
        %1544 = vst.msk [vmem:[#allocation3 + $0xa0] sm:$0xff] %vm1523, %v1468
        %1545 = vst.msk [vmem:[#allocation3 + $0xa8] sm:$0xff] %vm1523, %v1470
        %1546 = vst.msk [vmem:[#allocation3 + $0xb0] sm:$0xff] %vm1523, %v1472
        %1547 = vst.msk [vmem:[#allocation3 + $0xb8] sm:$0xff] %vm1523, %v1474
        %1548 = vst.msk [vmem:[#allocation3 + $0xc0] sm:$0xff] %vm1523, %v1476
        %1549 = vst.msk [vmem:[#allocation3 + $0xc8] sm:$0xff] %vm1523, %v1478
        %1550 = vst.msk [vmem:[#allocation3 + $0xd0] sm:$0xff] %vm1523, %v1480
        %1551 = vst.msk [vmem:[#allocation3 + $0xd8] sm:$0xff] %vm1523, %v1482
        %1552 = vst.msk [vmem:[#allocation3 + $0xe0] sm:$0xff] %vm1523, %v1484
        %1553 = vst.msk [vmem:[#allocation3 + $0xe8] sm:$0xff] %vm1523, %v1486
        %1554 = vst.msk [vmem:[#allocation3 + $0xf0] sm:$0xff] %vm1523, %v1488
        %1555 = vst.msk [vmem:[#allocation3 + $0xf8] sm:$0xff] %vm1523, %v1490
        %v1556 = vld [vmem:[%s1362 + $0x1] sm:$0xff]
        %v1557 = vld [vmem:[%s1362 + $0x9] sm:$0xff]
        %v1558 = vld [vmem:[%s1362 + $0x19] sm:$0xff]
        %v1559 = vld [vmem:[%s1362 + $0x21] sm:$0xff]
        %v1560 = vld [vmem:[%s1362 + $0x31] sm:$0xff]
        %v1561 = vld [vmem:[%s1362 + $0x39] sm:$0xff]
        %v1562 = vld [vmem:[%s1362 + $0x49] sm:$0xff]
        %v1563 = vld [vmem:[%s1362 + $0x51] sm:$0xff]
        %v1564 = vld [vmem:[%s1362 + $0x61] sm:$0xff]
        %v1565 = vld [vmem:[%s1362 + $0x69] sm:$0xff]
        %v1566 = vld [vmem:[%s1362 + $0x79] sm:$0xff]
        %v1567 = vld [vmem:[%s1362 + $0x81] sm:$0xff]
        %v1568 = vld [vmem:[%s1362 + $0x91] sm:$0xff]
        %v1569 = vld [vmem:[%s1362 + $0x99] sm:$0xff]
        %v1570 = vld [vmem:[%s1362 + $0xa9] sm:$0xff]
        %v1571 = vld [vmem:[%s1362 + $0xb1] sm:$0xff]
        %v1572 = vld [vmem:[%s1362 + $0xc1] sm:$0xff]
        %v1573 = vld [vmem:[%s1362 + $0xc9] sm:$0xff]
        %v1574 = vld [vmem:[%s1362 + $0xd9] sm:$0xff]
        %v1575 = vld [vmem:[%s1362 + $0xe1] sm:$0xff]
        %v1576 = vld [vmem:[%s1362 + $0xf1] sm:$0xff]
        %v1577 = vld [vmem:[%s1362 + $0xf9] sm:$0xff]
        %v1578 = vld [vmem:[%s1362 + $0x109] sm:$0xff]
        %v1579 = vld [vmem:[%s1362 + $0x111] sm:$0xff]
        %v1580 = vld [vmem:[%s1362 + $0x121] sm:$0xff]
        %v1581 = vld [vmem:[%s1362 + $0x129] sm:$0xff]
        %v1582 = vld [vmem:[%s1362 + $0x139] sm:$0xff]
        %v1583 = vld [vmem:[%s1362 + $0x141] sm:$0xff]
        %v1584 = vld [vmem:[%s1362 + $0x151] sm:$0xff]
        %v1585 = vld [vmem:[%s1362 + $0x159] sm:$0xff]
        %v1586 = vld [vmem:[%s1362 + $0x169] sm:$0xff]
        %v1587 = vld [vmem:[%s1362 + $0x171] sm:$0xff]
        %1620 = vrot.lane.b32.xlu0 %v1556, 28
        %v1621 = vpop.permute.xlu0 %1620
        %1622 = vrot.lane.b32.xlu0 %v1557, 28
        %v1623 = vpop.permute.xlu0 %1622
        %1624 = vrot.lane.b32.xlu0 %v1558, 28
        %v1625 = vpop.permute.xlu0 %1624
        %1626 = vrot.lane.b32.xlu0 %v1559, 28
        %v1627 = vpop.permute.xlu0 %1626
        %1628 = vrot.lane.b32.xlu0 %v1560, 28
        %v1629 = vpop.permute.xlu0 %1628
        %1630 = vrot.lane.b32.xlu0 %v1561, 28
        %v1631 = vpop.permute.xlu0 %1630
        %1632 = vrot.lane.b32.xlu0 %v1562, 28
        %v1633 = vpop.permute.xlu0 %1632
        %1634 = vrot.lane.b32.xlu0 %v1563, 28
        %v1635 = vpop.permute.xlu0 %1634
        %1636 = vrot.lane.b32.xlu0 %v1564, 28
        %v1637 = vpop.permute.xlu0 %1636
        %1638 = vrot.lane.b32.xlu0 %v1565, 28
        %v1639 = vpop.permute.xlu0 %1638
        %1640 = vrot.lane.b32.xlu0 %v1566, 28
        %v1641 = vpop.permute.xlu0 %1640
        %1642 = vrot.lane.b32.xlu0 %v1567, 28
        %v1643 = vpop.permute.xlu0 %1642
        %1644 = vrot.lane.b32.xlu0 %v1568, 28
        %v1645 = vpop.permute.xlu0 %1644
        %1646 = vrot.lane.b32.xlu0 %v1569, 28
        %v1647 = vpop.permute.xlu0 %1646
        %1648 = vrot.lane.b32.xlu0 %v1570, 28
        %v1649 = vpop.permute.xlu0 %1648
        %1650 = vrot.lane.b32.xlu0 %v1571, 28
        %v1651 = vpop.permute.xlu0 %1650
        %1652 = vrot.lane.b32.xlu0 %v1572, 28
        %v1653 = vpop.permute.xlu0 %1652
        %1654 = vrot.lane.b32.xlu0 %v1573, 28
        %v1655 = vpop.permute.xlu0 %1654
        %1656 = vrot.lane.b32.xlu0 %v1574, 28
        %v1657 = vpop.permute.xlu0 %1656
        %1658 = vrot.lane.b32.xlu0 %v1575, 28
        %v1659 = vpop.permute.xlu0 %1658
        %1660 = vrot.lane.b32.xlu0 %v1576, 28
        %v1661 = vpop.permute.xlu0 %1660
        %1662 = vrot.lane.b32.xlu0 %v1577, 28
        %v1663 = vpop.permute.xlu0 %1662
        %1664 = vrot.lane.b32.xlu0 %v1578, 28
        %v1665 = vpop.permute.xlu0 %1664
        %1666 = vrot.lane.b32.xlu0 %v1579, 28
        %v1667 = vpop.permute.xlu0 %1666
        %1668 = vrot.lane.b32.xlu0 %v1580, 28
        %v1669 = vpop.permute.xlu0 %1668
        %1670 = vrot.lane.b32.xlu0 %v1581, 28
        %v1671 = vpop.permute.xlu0 %1670
        %1672 = vrot.lane.b32.xlu0 %v1582, 28
        %v1673 = vpop.permute.xlu0 %1672
        %1674 = vrot.lane.b32.xlu0 %v1583, 28
        %v1675 = vpop.permute.xlu0 %1674
        %1676 = vrot.lane.b32.xlu0 %v1584, 28
        %v1677 = vpop.permute.xlu0 %1676
        %1678 = vrot.lane.b32.xlu0 %v1585, 28
        %v1679 = vpop.permute.xlu0 %1678
        %1680 = vrot.lane.b32.xlu0 %v1586, 28
        %v1681 = vpop.permute.xlu0 %1680
        %1682 = vrot.lane.b32.xlu0 %v1587, 28
        %v1683 = vpop.permute.xlu0 %1682
        %vm1716 = vcmask 261344
        %1717 = vst.msk [vmem:[#allocation3] sm:$0xff] %vm1716, %v1621
        %1718 = vst.msk [vmem:[#allocation3 + $0x8] sm:$0xff] %vm1716, %v1623
        %1719 = vst.msk [vmem:[#allocation3 + $0x10] sm:$0xff] %vm1716, %v1625
        %1720 = vst.msk [vmem:[#allocation3 + $0x18] sm:$0xff] %vm1716, %v1627
        %1721 = vst.msk [vmem:[#allocation3 + $0x20] sm:$0xff] %vm1716, %v1629
        %1722 = vst.msk [vmem:[#allocation3 + $0x28] sm:$0xff] %vm1716, %v1631
        %1723 = vst.msk [vmem:[#allocation3 + $0x30] sm:$0xff] %vm1716, %v1633
        %1724 = vst.msk [vmem:[#allocation3 + $0x38] sm:$0xff] %vm1716, %v1635
        %1725 = vst.msk [vmem:[#allocation3 + $0x40] sm:$0xff] %vm1716, %v1637
        %1726 = vst.msk [vmem:[#allocation3 + $0x48] sm:$0xff] %vm1716, %v1639
        %1727 = vst.msk [vmem:[#allocation3 + $0x50] sm:$0xff] %vm1716, %v1641
        %1728 = vst.msk [vmem:[#allocation3 + $0x58] sm:$0xff] %vm1716, %v1643
        %1729 = vst.msk [vmem:[#allocation3 + $0x60] sm:$0xff] %vm1716, %v1645
        %1730 = vst.msk [vmem:[#allocation3 + $0x68] sm:$0xff] %vm1716, %v1647
        %1731 = vst.msk [vmem:[#allocation3 + $0x70] sm:$0xff] %vm1716, %v1649
        %1732 = vst.msk [vmem:[#allocation3 + $0x78] sm:$0xff] %vm1716, %v1651
        %1733 = vst.msk [vmem:[#allocation3 + $0x80] sm:$0xff] %vm1716, %v1653
        %1734 = vst.msk [vmem:[#allocation3 + $0x88] sm:$0xff] %vm1716, %v1655
        %1735 = vst.msk [vmem:[#allocation3 + $0x90] sm:$0xff] %vm1716, %v1657
        %1736 = vst.msk [vmem:[#allocation3 + $0x98] sm:$0xff] %vm1716, %v1659
        %1737 = vst.msk [vmem:[#allocation3 + $0xa0] sm:$0xff] %vm1716, %v1661
        %1738 = vst.msk [vmem:[#allocation3 + $0xa8] sm:$0xff] %vm1716, %v1663
        %1739 = vst.msk [vmem:[#allocation3 + $0xb0] sm:$0xff] %vm1716, %v1665
        %1740 = vst.msk [vmem:[#allocation3 + $0xb8] sm:$0xff] %vm1716, %v1667
        %1741 = vst.msk [vmem:[#allocation3 + $0xc0] sm:$0xff] %vm1716, %v1669
        %1742 = vst.msk [vmem:[#allocation3 + $0xc8] sm:$0xff] %vm1716, %v1671
        %1743 = vst.msk [vmem:[#allocation3 + $0xd0] sm:$0xff] %vm1716, %v1673
        %1744 = vst.msk [vmem:[#allocation3 + $0xd8] sm:$0xff] %vm1716, %v1675
        %1745 = vst.msk [vmem:[#allocation3 + $0xe0] sm:$0xff] %vm1716, %v1677
        %1746 = vst.msk [vmem:[#allocation3 + $0xe8] sm:$0xff] %vm1716, %v1679
        %1747 = vst.msk [vmem:[#allocation3 + $0xf0] sm:$0xff] %vm1716, %v1681
        %1748 = vst.msk [vmem:[#allocation3 + $0xf8] sm:$0xff] %vm1716, %v1683
        %v1749 = vld [vmem:[%s1362 + $0x2] sm:$0xff]
        %v1750 = vld [vmem:[%s1362 + $0xa] sm:$0xff]
        %v1751 = vld [vmem:[%s1362 + $0x1a] sm:$0xff]
        %v1752 = vld [vmem:[%s1362 + $0x22] sm:$0xff]
        %v1753 = vld [vmem:[%s1362 + $0x32] sm:$0xff]
        %v1754 = vld [vmem:[%s1362 + $0x3a] sm:$0xff]
        %v1755 = vld [vmem:[%s1362 + $0x4a] sm:$0xff]
        %v1756 = vld [vmem:[%s1362 + $0x52] sm:$0xff]
        %v1757 = vld [vmem:[%s1362 + $0x62] sm:$0xff]
        %v1758 = vld [vmem:[%s1362 + $0x6a] sm:$0xff]
        %v1759 = vld [vmem:[%s1362 + $0x7a] sm:$0xff]
        %v1760 = vld [vmem:[%s1362 + $0x82] sm:$0xff]
        %v1761 = vld [vmem:[%s1362 + $0x92] sm:$0xff]
        %v1762 = vld [vmem:[%s1362 + $0x9a] sm:$0xff]
        %v1763 = vld [vmem:[%s1362 + $0xaa] sm:$0xff]
        %v1764 = vld [vmem:[%s1362 + $0xb2] sm:$0xff]
        %v1765 = vld [vmem:[%s1362 + $0xc2] sm:$0xff]
        %v1766 = vld [vmem:[%s1362 + $0xca] sm:$0xff]
        %v1767 = vld [vmem:[%s1362 + $0xda] sm:$0xff]
        %v1768 = vld [vmem:[%s1362 + $0xe2] sm:$0xff]
        %v1769 = vld [vmem:[%s1362 + $0xf2] sm:$0xff]
        %v1770 = vld [vmem:[%s1362 + $0xfa] sm:$0xff]
        %v1771 = vld [vmem:[%s1362 + $0x10a] sm:$0xff]
        %v1772 = vld [vmem:[%s1362 + $0x112] sm:$0xff]
        %v1773 = vld [vmem:[%s1362 + $0x122] sm:$0xff]
        %v1774 = vld [vmem:[%s1362 + $0x12a] sm:$0xff]
        %v1775 = vld [vmem:[%s1362 + $0x13a] sm:$0xff]
        %v1776 = vld [vmem:[%s1362 + $0x142] sm:$0xff]
        %v1777 = vld [vmem:[%s1362 + $0x152] sm:$0xff]
        %v1778 = vld [vmem:[%s1362 + $0x15a] sm:$0xff]
        %v1779 = vld [vmem:[%s1362 + $0x16a] sm:$0xff]
        %v1780 = vld [vmem:[%s1362 + $0x172] sm:$0xff]
        %1813 = vrot.lane.b32.xlu0 %v1749, 32
        %v1814 = vpop.permute.xlu0 %1813
        %1815 = vrot.lane.b32.xlu0 %v1750, 32
        %v1816 = vpop.permute.xlu0 %1815
        %1817 = vrot.lane.b32.xlu0 %v1751, 32
        %v1818 = vpop.permute.xlu0 %1817
        %1819 = vrot.lane.b32.xlu0 %v1752, 32
        %v1820 = vpop.permute.xlu0 %1819
        %1821 = vrot.lane.b32.xlu0 %v1753, 32
        %v1822 = vpop.permute.xlu0 %1821
        %1823 = vrot.lane.b32.xlu0 %v1754, 32
        %v1824 = vpop.permute.xlu0 %1823
        %1825 = vrot.lane.b32.xlu0 %v1755, 32
        %v1826 = vpop.permute.xlu0 %1825
        %1827 = vrot.lane.b32.xlu0 %v1756, 32
        %v1828 = vpop.permute.xlu0 %1827
        %1829 = vrot.lane.b32.xlu0 %v1757, 32
        %v1830 = vpop.permute.xlu0 %1829
        %1831 = vrot.lane.b32.xlu0 %v1758, 32
        %v1832 = vpop.permute.xlu0 %1831
        %1833 = vrot.lane.b32.xlu0 %v1759, 32
        %v1834 = vpop.permute.xlu0 %1833
        %1835 = vrot.lane.b32.xlu0 %v1760, 32
        %v1836 = vpop.permute.xlu0 %1835
        %1837 = vrot.lane.b32.xlu0 %v1761, 32
        %v1838 = vpop.permute.xlu0 %1837
        %1839 = vrot.lane.b32.xlu0 %v1762, 32
        %v1840 = vpop.permute.xlu0 %1839
        %1841 = vrot.lane.b32.xlu0 %v1763, 32
        %v1842 = vpop.permute.xlu0 %1841
        %1843 = vrot.lane.b32.xlu0 %v1764, 32
        %v1844 = vpop.permute.xlu0 %1843
        %1845 = vrot.lane.b32.xlu0 %v1765, 32
        %v1846 = vpop.permute.xlu0 %1845
        %1847 = vrot.lane.b32.xlu0 %v1766, 32
        %v1848 = vpop.permute.xlu0 %1847
        %1849 = vrot.lane.b32.xlu0 %v1767, 32
        %v1850 = vpop.permute.xlu0 %1849
        %1851 = vrot.lane.b32.xlu0 %v1768, 32
        %v1852 = vpop.permute.xlu0 %1851
        %1853 = vrot.lane.b32.xlu0 %v1769, 32
        %v1854 = vpop.permute.xlu0 %1853
        %1855 = vrot.lane.b32.xlu0 %v1770, 32
        %v1856 = vpop.permute.xlu0 %1855
        %1857 = vrot.lane.b32.xlu0 %v1771, 32
        %v1858 = vpop.permute.xlu0 %1857
        %1859 = vrot.lane.b32.xlu0 %v1772, 32
        %v1860 = vpop.permute.xlu0 %1859
        %1861 = vrot.lane.b32.xlu0 %v1773, 32
        %v1862 = vpop.permute.xlu0 %1861
        %1863 = vrot.lane.b32.xlu0 %v1774, 32
        %v1864 = vpop.permute.xlu0 %1863
        %1865 = vrot.lane.b32.xlu0 %v1775, 32
        %v1866 = vpop.permute.xlu0 %1865
        %1867 = vrot.lane.b32.xlu0 %v1776, 32
        %v1868 = vpop.permute.xlu0 %1867
        %1869 = vrot.lane.b32.xlu0 %v1777, 32
        %v1870 = vpop.permute.xlu0 %1869
        %1871 = vrot.lane.b32.xlu0 %v1778, 32
        %v1872 = vpop.permute.xlu0 %1871
        %1873 = vrot.lane.b32.xlu0 %v1779, 32
        %v1874 = vpop.permute.xlu0 %1873
        %1875 = vrot.lane.b32.xlu0 %v1780, 32
        %v1876 = vpop.permute.xlu0 %1875
        %vm1909 = vcmask 294144
        %1910 = vst.msk [vmem:[#allocation3] sm:$0xff] %vm1909, %v1814
        %1911 = vst.msk [vmem:[#allocation3 + $0x8] sm:$0xff] %vm1909, %v1816
        %1912 = vst.msk [vmem:[#allocation3 + $0x10] sm:$0xff] %vm1909, %v1818
        %1913 = vst.msk [vmem:[#allocation3 + $0x18] sm:$0xff] %vm1909, %v1820
        %1914 = vst.msk [vmem:[#allocation3 + $0x20] sm:$0xff] %vm1909, %v1822
        %1915 = vst.msk [vmem:[#allocation3 + $0x28] sm:$0xff] %vm1909, %v1824
        %1916 = vst.msk [vmem:[#allocation3 + $0x30] sm:$0xff] %vm1909, %v1826
        %1917 = vst.msk [vmem:[#allocation3 + $0x38] sm:$0xff] %vm1909, %v1828
        %1918 = vst.msk [vmem:[#allocation3 + $0x40] sm:$0xff] %vm1909, %v1830
        %1919 = vst.msk [vmem:[#allocation3 + $0x48] sm:$0xff] %vm1909, %v1832
        %1920 = vst.msk [vmem:[#allocation3 + $0x50] sm:$0xff] %vm1909, %v1834
        %1921 = vst.msk [vmem:[#allocation3 + $0x58] sm:$0xff] %vm1909, %v1836
        %1922 = vst.msk [vmem:[#allocation3 + $0x60] sm:$0xff] %vm1909, %v1838
        %1923 = vst.msk [vmem:[#allocation3 + $0x68] sm:$0xff] %vm1909, %v1840
        %1924 = vst.msk [vmem:[#allocation3 + $0x70] sm:$0xff] %vm1909, %v1842
        %1925 = vst.msk [vmem:[#allocation3 + $0x78] sm:$0xff] %vm1909, %v1844
        %1926 = vst.msk [vmem:[#allocation3 + $0x80] sm:$0xff] %vm1909, %v1846
        %1927 = vst.msk [vmem:[#allocation3 + $0x88] sm:$0xff] %vm1909, %v1848
        %1928 = vst.msk [vmem:[#allocation3 + $0x90] sm:$0xff] %vm1909, %v1850
        %1929 = vst.msk [vmem:[#allocation3 + $0x98] sm:$0xff] %vm1909, %v1852
        %1930 = vst.msk [vmem:[#allocation3 + $0xa0] sm:$0xff] %vm1909, %v1854
        %1931 = vst.msk [vmem:[#allocation3 + $0xa8] sm:$0xff] %vm1909, %v1856
        %1932 = vst.msk [vmem:[#allocation3 + $0xb0] sm:$0xff] %vm1909, %v1858
        %1933 = vst.msk [vmem:[#allocation3 + $0xb8] sm:$0xff] %vm1909, %v1860
        %1934 = vst.msk [vmem:[#allocation3 + $0xc0] sm:$0xff] %vm1909, %v1862
        %1935 = vst.msk [vmem:[#allocation3 + $0xc8] sm:$0xff] %vm1909, %v1864
        %1936 = vst.msk [vmem:[#allocation3 + $0xd0] sm:$0xff] %vm1909, %v1866
        %1937 = vst.msk [vmem:[#allocation3 + $0xd8] sm:$0xff] %vm1909, %v1868
        %1938 = vst.msk [vmem:[#allocation3 + $0xe0] sm:$0xff] %vm1909, %v1870
        %1939 = vst.msk [vmem:[#allocation3 + $0xe8] sm:$0xff] %vm1909, %v1872
        %1940 = vst.msk [vmem:[#allocation3 + $0xf0] sm:$0xff] %vm1909, %v1874
        %1941 = vst.msk [vmem:[#allocation3 + $0xf8] sm:$0xff] %vm1909, %v1876
      $region36: #{tpu_custom_call.1} parent=31 // pred_fallthru
        _
      %v1942 = vld [vmem:[#allocation3] sm:$0xff]
      %v1943 = vld [vmem:[#allocation3 + $0x8] sm:$0xff]
      %v1944 = vld [vmem:[#allocation3 + $0x10] sm:$0xff]
      %v1945 = vld [vmem:[#allocation3 + $0x18] sm:$0xff]
      %v1946 = vld [vmem:[#allocation3 + $0x20] sm:$0xff]
      %v1947 = vld [vmem:[#allocation3 + $0x28] sm:$0xff]
      %v1948 = vld [vmem:[#allocation3 + $0x30] sm:$0xff]
      %v1949 = vld [vmem:[#allocation3 + $0x38] sm:$0xff]
      %v1950 = vld [vmem:[#allocation3 + $0x40] sm:$0xff]
      %v1951 = vld [vmem:[#allocation3 + $0x48] sm:$0xff]
      %v1952 = vld [vmem:[#allocation3 + $0x50] sm:$0xff]
      %v1953 = vld [vmem:[#allocation3 + $0x58] sm:$0xff]
      %v1954 = vld [vmem:[#allocation3 + $0x60] sm:$0xff]
      %v1955 = vld [vmem:[#allocation3 + $0x68] sm:$0xff]
      %v1956 = vld [vmem:[#allocation3 + $0x70] sm:$0xff]
      %v1957 = vld [vmem:[#allocation3 + $0x78] sm:$0xff]
      %v1958 = vld [vmem:[#allocation3 + $0x80] sm:$0xff]
      %v1959 = vld [vmem:[#allocation3 + $0x88] sm:$0xff]
      %v1960 = vld [vmem:[#allocation3 + $0x90] sm:$0xff]
      %v1961 = vld [vmem:[#allocation3 + $0x98] sm:$0xff]
      %v1962 = vld [vmem:[#allocation3 + $0xa0] sm:$0xff]
      %v1963 = vld [vmem:[#allocation3 + $0xa8] sm:$0xff]
      %v1964 = vld [vmem:[#allocation3 + $0xb0] sm:$0xff]
      %v1965 = vld [vmem:[#allocation3 + $0xb8] sm:$0xff]
      %v1966 = vld [vmem:[#allocation3 + $0xc0] sm:$0xff]
      %v1967 = vld [vmem:[#allocation3 + $0xc8] sm:$0xff]
      %v1968 = vld [vmem:[#allocation3 + $0xd0] sm:$0xff]
      %v1969 = vld [vmem:[#allocation3 + $0xd8] sm:$0xff]
      %v1970 = vld [vmem:[#allocation3 + $0xe0] sm:$0xff]
      %v1971 = vld [vmem:[#allocation3 + $0xe8] sm:$0xff]
      %v1972 = vld [vmem:[#allocation3 + $0xf0] sm:$0xff]
      %v1973 = vld [vmem:[#allocation3 + $0xf8] sm:$0xff]
      %v1974 = vld [vmem:[%s210] sm:$0xff]
      %v1975 = vld [vmem:[%s210 + $0x8] sm:$0xff]
      %v1976 = vld [vmem:[%s210 + $0x10] sm:$0xff]
      %v1977 = vld [vmem:[%s210 + $0x18] sm:$0xff]
      %v1978 = vld [vmem:[%s210 + $0x20] sm:$0xf]
      %v1979 = vld [vmem:[%s213] sm:$0x1]
      %v1981 = vlaneseq
      %v1982 = vshrl.u32 %v1981, 7
      %v1983 = vsub.s32 0, %v1982
      %v1984 = vrot.slane %v1979, %v1983
      %vm1986 = vcmask 293888
      %v1988 = vsel %vm1986, %v1942, 0
      %v1991 = vsel %vm1986, %v1943, 0
      %v1994 = vsel %vm1986, %v1944, 0
      %v1997 = vsel %vm1986, %v1945, 0
      %v2000 = vsel %vm1986, %v1946, 0
      %v2003 = vsel %vm1986, %v1947, 0
      %v2006 = vsel %vm1986, %v1948, 0
      %v2009 = vsel %vm1986, %v1949, 0
      %v2012 = vsel %vm1986, %v1950, 0
      %v2015 = vsel %vm1986, %v1951, 0
      %v2018 = vsel %vm1986, %v1952, 0
      %v2021 = vsel %vm1986, %v1953, 0
      %v2024 = vsel %vm1986, %v1954, 0
      %v2027 = vsel %vm1986, %v1955, 0
      %v2030 = vsel %vm1986, %v1956, 0
      %v2033 = vsel %vm1986, %v1957, 0
      %v2036 = vsel %vm1986, %v1958, 0
      %v2039 = vsel %vm1986, %v1959, 0
      %v2042 = vsel %vm1986, %v1960, 0
      %v2045 = vsel %vm1986, %v1961, 0
      %v2048 = vsel %vm1986, %v1962, 0
      %v2051 = vsel %vm1986, %v1963, 0
      %v2054 = vsel %vm1986, %v1964, 0
      %v2057 = vsel %vm1986, %v1965, 0
      %v2060 = vsel %vm1986, %v1966, 0
      %v2063 = vsel %vm1986, %v1967, 0
      %v2066 = vsel %vm1986, %v1968, 0
      %v2069 = vsel %vm1986, %v1969, 0
      %v2072 = vsel %vm1986, %v1970, 0
      %v2075 = vsel %vm1986, %v1971, 0
      %v2078 = vsel %vm1986, %v1972, 0
      %v2081 = vsel %vm1986, %v1973, 0
      %vm2083 = vcmask 1043456
      %v2085 = vsel %vm2083, %v1978, 0
      %2087 = vmatprep.subr.mxu0 0.0
      %2088 = vmatpush1.msra.mxu0 %v1974
      %2089 = vmatprep.subr.mxu0 0.0
      %2090 = vmatpush1.msra.mxu0 %v1975
      %2091 = vmatprep.subr.mxu0 0.0
      %2092 = vmatpush1.msra.mxu0 %v1976
      %2093 = vmatprep.subr.mxu0 0.0
      %2094 = vmatpush1.msra.mxu0 %v1977
      %2095 = vmatprep.subr.mxu0 0.0
      %2096 = vmatpush1.msra.mxu0 %v2085
      %2097 = vmatprep.subr.mxu0 0.0
      %2098 = vmatpush1.msra.mxu0 0.0
      %2099 = vmatprep.subr.mxu0 0.0
      %2100 = vmatpush1.msra.mxu0 0.0
      %2101 = vmatprep.subr.mxu0 0.0
      %2102 = vmatpush1.msra.mxu0 0.0
      %2103 = vmatprep.subr.mxu0 0.0
      %2104 = vmatpush1.msra.mxu0 0.0
      %2105 = vmatprep.subr.mxu0 0.0
      %2106 = vmatpush1.msra.mxu0 0.0
      %2107 = vmatprep.subr.mxu0 0.0
      %2108 = vmatpush1.msra.mxu0 0.0
      %2109 = vmatprep.subr.mxu0 0.0
      %2110 = vmatpush1.msra.mxu0 0.0
      %2111 = vmatprep.subr.mxu0 0.0
      %2112 = vmatpush1.msra.mxu0 0.0
      %2113 = vmatprep.subr.mxu0 0.0
      %2114 = vmatpush1.msra.mxu0 0.0
      %2115 = vmatprep.subr.mxu0 0.0
      %2116 = vmatpush1.msra.mxu0 0.0
      %2117 = vmatprep.subr.mxu0 0.0
      %2118 = vmatpush1.msra.mxu0 0.0
      %2119 = vmatprep.subr.mxu0 0.0
      %2120 = vmatpush1.msra.mxu0 0.0
      %2121 = vmatprep.subr.mxu0 0.0
      %2122 = vmatpush1.msra.mxu0 0.0
      %2123 = vmatprep.subr.mxu0 0.0
      %2124 = vmatpush1.msra.mxu0 0.0
      %2125 = vmatprep.subr.mxu0 0.0
      %2126 = vmatpush1.msra.mxu0 0.0
      %2127 = vmatprep.subr.mxu0 0.0
      %2128 = vmatpush1.msra.mxu0 0.0
      %2129 = vmatprep.subr.mxu0 0.0
      %2130 = vmatpush1.msra.mxu0 0.0
      %2131 = vmatprep.subr.mxu0 0.0
      %2132 = vmatpush1.msra.mxu0 0.0
      %2133 = vmatprep.subr.mxu0 0.0
      %2134 = vmatpush1.msra.mxu0 0.0
      %2135 = vmatprep.subr.mxu0 0.0
      %2136 = vmatpush1.msra.mxu0 0.0
      %2137 = vmatprep.subr.mxu0 0.0
      %2138 = vmatpush1.msra.mxu0 0.0
      %2139 = vmatprep.subr.mxu0 0.0
      %2140 = vmatpush1.msra.mxu0 0.0
      %2141 = vmatprep.subr.mxu0 0.0
      %2142 = vmatpush1.msra.mxu0 0.0
      %2143 = vmatprep.subr.mxu0 0.0
      %2144 = vmatpush1.msra.mxu0 0.0
      %2145 = vmatprep.subr.mxu0 0.0
      %2146 = vmatpush1.msra.mxu0 0.0
      %2147 = vmatprep.subr.mxu0 0.0
      %2148 = vmatpush1.msra.mxu0 0.0
      %2149 = vmatprep.subr.mxu0 0.0
      %2150 = vmatpush1.msra.mxu0 0.0
      %2151 = vmatprep.mubr.f32.mxu0 0.0
      %2152 = vmatmul.mubr.f32.gmra.mrb[0].mxu0 %v1988
      %v2153 = vpop.f32.mrb[0].mxu0
      %v2154 = vadd.f32 %v1984, %v2153
      %v2155 = vpop.f32.mrb[0].mxu0
      %2156 = vmatprep.mubr.f32.mxu0 0.0
      %2157 = vmatmul.mubr.f32.gmra.mrb[0].mxu0 %v1991
      %v2158 = vpop.f32.mrb[0].mxu0
      %v2159 = vadd.f32 %v1984, %v2158
      %v2160 = vpop.f32.mrb[0].mxu0
      %2161 = vmatprep.mubr.f32.mxu0 0.0
      %2162 = vmatmul.mubr.f32.gmra.mrb[0].mxu0 %v1994
      %v2163 = vpop.f32.mrb[0].mxu0
      %v2164 = vadd.f32 %v1984, %v2163
      %v2165 = vpop.f32.mrb[0].mxu0
      %2166 = vmatprep.mubr.f32.mxu0 0.0
      %2167 = vmatmul.mubr.f32.gmra.mrb[0].mxu0 %v1997
      %v2168 = vpop.f32.mrb[0].mxu0
      %v2169 = vadd.f32 %v1984, %v2168
      %v2170 = vpop.f32.mrb[0].mxu0
      %2171 = vmatprep.mubr.f32.mxu0 0.0
      %2172 = vmatmul.mubr.f32.gmra.mrb[0].mxu0 %v2000
      %v2173 = vpop.f32.mrb[0].mxu0
      %v2174 = vadd.f32 %v1984, %v2173
      %v2175 = vpop.f32.mrb[0].mxu0
      %2176 = vmatprep.mubr.f32.mxu0 0.0
      %2177 = vmatmul.mubr.f32.gmra.mrb[0].mxu0 %v2003
      %v2178 = vpop.f32.mrb[0].mxu0
      %v2179 = vadd.f32 %v1984, %v2178
      %v2180 = vpop.f32.mrb[0].mxu0
      %2181 = vmatprep.mubr.f32.mxu0 0.0
      %2182 = vmatmul.mubr.f32.gmra.mrb[0].mxu0 %v2006
      %v2183 = vpop.f32.mrb[0].mxu0
      %v2184 = vadd.f32 %v1984, %v2183
      %v2185 = vpop.f32.mrb[0].mxu0
      %2186 = vmatprep.mubr.f32.mxu0 0.0
      %2187 = vmatmul.mubr.f32.gmra.mrb[0].mxu0 %v2009
      %v2188 = vpop.f32.mrb[0].mxu0
      %v2189 = vadd.f32 %v1984, %v2188
      %v2190 = vpop.f32.mrb[0].mxu0
      %2191 = vmatprep.mubr.f32.mxu0 0.0
      %2192 = vmatmul.mubr.f32.gmra.mrb[0].mxu0 %v2012
      %v2193 = vpop.f32.mrb[0].mxu0
      %v2194 = vadd.f32 %v1984, %v2193
      %v2195 = vpop.f32.mrb[0].mxu0
      %2196 = vmatprep.mubr.f32.mxu0 0.0
      %2197 = vmatmul.mubr.f32.gmra.mrb[0].mxu0 %v2015
      %v2198 = vpop.f32.mrb[0].mxu0
      %v2199 = vadd.f32 %v1984, %v2198
      %v2200 = vpop.f32.mrb[0].mxu0
      %2201 = vmatprep.mubr.f32.mxu0 0.0
      %2202 = vmatmul.mubr.f32.gmra.mrb[0].mxu0 %v2018
      %v2203 = vpop.f32.mrb[0].mxu0
      %v2204 = vadd.f32 %v1984, %v2203
      %v2205 = vpop.f32.mrb[0].mxu0
      %2206 = vmatprep.mubr.f32.mxu0 0.0
      %2207 = vmatmul.mubr.f32.gmra.mrb[0].mxu0 %v2021
      %v2208 = vpop.f32.mrb[0].mxu0
      %v2209 = vadd.f32 %v1984, %v2208
      %v2210 = vpop.f32.mrb[0].mxu0
      %2211 = vmatprep.mubr.f32.mxu0 0.0
      %2212 = vmatmul.mubr.f32.gmra.mrb[0].mxu0 %v2024
      %v2213 = vpop.f32.mrb[0].mxu0
      %v2214 = vadd.f32 %v1984, %v2213
      %v2215 = vpop.f32.mrb[0].mxu0
      %2216 = vmatprep.mubr.f32.mxu0 0.0
      %2217 = vmatmul.mubr.f32.gmra.mrb[0].mxu0 %v2027
      %v2218 = vpop.f32.mrb[0].mxu0
      %v2219 = vadd.f32 %v1984, %v2218
      %v2220 = vpop.f32.mrb[0].mxu0
      %2221 = vmatprep.mubr.f32.mxu0 0.0
      %2222 = vmatmul.mubr.f32.gmra.mrb[0].mxu0 %v2030
      %v2223 = vpop.f32.mrb[0].mxu0
      %v2224 = vadd.f32 %v1984, %v2223
      %v2225 = vpop.f32.mrb[0].mxu0
      %2226 = vmatprep.mubr.f32.mxu0 0.0
      %2227 = vmatmul.mubr.f32.gmra.mrb[0].mxu0 %v2033
      %v2228 = vpop.f32.mrb[0].mxu0
      %v2229 = vadd.f32 %v1984, %v2228
      %v2230 = vpop.f32.mrb[0].mxu0
      %2231 = vmatprep.mubr.f32.mxu0 0.0
      %2232 = vmatmul.mubr.f32.gmra.mrb[0].mxu0 %v2036
      %v2233 = vpop.f32.mrb[0].mxu0
      %v2234 = vadd.f32 %v1984, %v2233
      %v2235 = vpop.f32.mrb[0].mxu0
      %2236 = vmatprep.mubr.f32.mxu0 0.0
      %2237 = vmatmul.mubr.f32.gmra.mrb[0].mxu0 %v2039
      %v2238 = vpop.f32.mrb[0].mxu0
      %v2239 = vadd.f32 %v1984, %v2238
      %v2240 = vpop.f32.mrb[0].mxu0
      %2241 = vmatprep.mubr.f32.mxu0 0.0
      %2242 = vmatmul.mubr.f32.gmra.mrb[0].mxu0 %v2042
      %v2243 = vpop.f32.mrb[0].mxu0
      %v2244 = vadd.f32 %v1984, %v2243
      %v2245 = vpop.f32.mrb[0].mxu0
      %2246 = vmatprep.mubr.f32.mxu0 0.0
      %2247 = vmatmul.mubr.f32.gmra.mrb[0].mxu0 %v2045
      %v2248 = vpop.f32.mrb[0].mxu0
      %v2249 = vadd.f32 %v1984, %v2248
      %v2250 = vpop.f32.mrb[0].mxu0
      %2251 = vmatprep.mubr.f32.mxu0 0.0
      %2252 = vmatmul.mubr.f32.gmra.mrb[0].mxu0 %v2048
      %v2253 = vpop.f32.mrb[0].mxu0
      %v2254 = vadd.f32 %v1984, %v2253
      %v2255 = vpop.f32.mrb[0].mxu0
      %2256 = vmatprep.mubr.f32.mxu0 0.0
      %2257 = vmatmul.mubr.f32.gmra.mrb[0].mxu0 %v2051
      %v2258 = vpop.f32.mrb[0].mxu0
      %v2259 = vadd.f32 %v1984, %v2258
      %v2260 = vpop.f32.mrb[0].mxu0
      %2261 = vmatprep.mubr.f32.mxu0 0.0
      %2262 = vmatmul.mubr.f32.gmra.mrb[0].mxu0 %v2054
      %v2263 = vpop.f32.mrb[0].mxu0
      %v2264 = vadd.f32 %v1984, %v2263
      %v2265 = vpop.f32.mrb[0].mxu0
      %2266 = vmatprep.mubr.f32.mxu0 0.0
      %2267 = vmatmul.mubr.f32.gmra.mrb[0].mxu0 %v2057
      %v2268 = vpop.f32.mrb[0].mxu0
      %v2269 = vadd.f32 %v1984, %v2268
      %v2270 = vpop.f32.mrb[0].mxu0
      %2271 = vmatprep.mubr.f32.mxu0 0.0
      %2272 = vmatmul.mubr.f32.gmra.mrb[0].mxu0 %v2060
      %v2273 = vpop.f32.mrb[0].mxu0
      %v2274 = vadd.f32 %v1984, %v2273
      %v2275 = vpop.f32.mrb[0].mxu0
      %2276 = vmatprep.mubr.f32.mxu0 0.0
      %2277 = vmatmul.mubr.f32.gmra.mrb[0].mxu0 %v2063
      %v2278 = vpop.f32.mrb[0].mxu0
      %v2279 = vadd.f32 %v1984, %v2278
      %v2280 = vpop.f32.mrb[0].mxu0
      %2281 = vmatprep.mubr.f32.mxu0 0.0
      %2282 = vmatmul.mubr.f32.gmra.mrb[0].mxu0 %v2066
      %v2283 = vpop.f32.mrb[0].mxu0
      %v2284 = vadd.f32 %v1984, %v2283
      %v2285 = vpop.f32.mrb[0].mxu0
      %2286 = vmatprep.mubr.f32.mxu0 0.0
      %2287 = vmatmul.mubr.f32.gmra.mrb[0].mxu0 %v2069
      %v2288 = vpop.f32.mrb[0].mxu0
      %v2289 = vadd.f32 %v1984, %v2288
      %v2290 = vpop.f32.mrb[0].mxu0
      %2291 = vmatprep.mubr.f32.mxu0 0.0
      %2292 = vmatmul.mubr.f32.gmra.mrb[0].mxu0 %v2072
      %v2293 = vpop.f32.mrb[0].mxu0
      %v2294 = vadd.f32 %v1984, %v2293
      %v2295 = vpop.f32.mrb[0].mxu0
      %2296 = vmatprep.mubr.f32.mxu0 0.0
      %2297 = vmatmul.mubr.f32.gmra.mrb[0].mxu0 %v2075
      %v2298 = vpop.f32.mrb[0].mxu0
      %v2299 = vadd.f32 %v1984, %v2298
      %v2300 = vpop.f32.mrb[0].mxu0
      %2301 = vmatprep.mubr.f32.mxu0 0.0
      %2302 = vmatmul.mubr.f32.gmra.mrb[0].mxu0 %v2078
      %v2303 = vpop.f32.mrb[0].mxu0
      %v2304 = vadd.f32 %v1984, %v2303
      %v2305 = vpop.f32.mrb[0].mxu0
      %2306 = vmatprep.mubr.f32.mxu0 0.0
      %2307 = vmatmul.mubr.f32.gmra.mrb[0].mxu0 %v2081
      %v2308 = vpop.f32.mrb[0].mxu0
      %v2309 = vadd.f32 %v1984, %v2308
      %v2310 = vpop.f32.mrb[0].mxu0
      %2311 = vdwg.mxu0
      %v2312 = vmax.f32 %v2154, 0.0
      %v2313 = vmax.f32 %v2159, 0.0
      %v2314 = vmax.f32 %v2164, 0.0
      %v2315 = vmax.f32 %v2169, 0.0
      %v2316 = vmax.f32 %v2174, 0.0
      %v2317 = vmax.f32 %v2179, 0.0
      %v2318 = vmax.f32 %v2184, 0.0
      %v2319 = vmax.f32 %v2189, 0.0
      %v2320 = vmax.f32 %v2194, 0.0
      %v2321 = vmax.f32 %v2199, 0.0
      %v2322 = vmax.f32 %v2204, 0.0
      %v2323 = vmax.f32 %v2209, 0.0
      %v2324 = vmax.f32 %v2214, 0.0
      %v2325 = vmax.f32 %v2219, 0.0
      %v2326 = vmax.f32 %v2224, 0.0
      %v2327 = vmax.f32 %v2229, 0.0
      %v2328 = vmax.f32 %v2234, 0.0
      %v2329 = vmax.f32 %v2239, 0.0
      %v2330 = vmax.f32 %v2244, 0.0
      %v2331 = vmax.f32 %v2249, 0.0
      %v2332 = vmax.f32 %v2254, 0.0
      %v2333 = vmax.f32 %v2259, 0.0
      %v2334 = vmax.f32 %v2264, 0.0
      %v2335 = vmax.f32 %v2269, 0.0
      %v2336 = vmax.f32 %v2274, 0.0
      %v2337 = vmax.f32 %v2279, 0.0
      %v2338 = vmax.f32 %v2284, 0.0
      %v2339 = vmax.f32 %v2289, 0.0
      %v2340 = vmax.f32 %v2294, 0.0
      %v2341 = vmax.f32 %v2299, 0.0
      %v2342 = vmax.f32 %v2304, 0.0
      %v2343 = vmax.f32 %v2309, 0.0
      %vm2344 = vcmask 64512
      %2345 = vst.msk [vmem:[%s221] sm:$0xff] %vm2344, %v2312
      %2346 = vst.msk [vmem:[%s221 + $0x8] sm:$0xff] %vm2344, %v2313
      %2347 = vst.msk [vmem:[%s221 + $0x10] sm:$0xff] %vm2344, %v2314
      %2348 = vst.msk [vmem:[%s221 + $0x18] sm:$0xff] %vm2344, %v2315
      %2349 = vst.msk [vmem:[%s221 + $0x20] sm:$0xff] %vm2344, %v2316
      %2350 = vst.msk [vmem:[%s221 + $0x28] sm:$0xff] %vm2344, %v2317
      %2351 = vst.msk [vmem:[%s221 + $0x30] sm:$0xff] %vm2344, %v2318
      %2352 = vst.msk [vmem:[%s221 + $0x38] sm:$0xff] %vm2344, %v2319
      %2353 = vst.msk [vmem:[%s221 + $0x40] sm:$0xff] %vm2344, %v2320
      %2354 = vst.msk [vmem:[%s221 + $0x48] sm:$0xff] %vm2344, %v2321
      %2355 = vst.msk [vmem:[%s221 + $0x50] sm:$0xff] %vm2344, %v2322
      %2356 = vst.msk [vmem:[%s221 + $0x58] sm:$0xff] %vm2344, %v2323
      %2357 = vst.msk [vmem:[%s221 + $0x60] sm:$0xff] %vm2344, %v2324
      %2358 = vst.msk [vmem:[%s221 + $0x68] sm:$0xff] %vm2344, %v2325
      %2359 = vst.msk [vmem:[%s221 + $0x70] sm:$0xff] %vm2344, %v2326
      %2360 = vst.msk [vmem:[%s221 + $0x78] sm:$0xff] %vm2344, %v2327
      %2361 = vst.msk [vmem:[%s221 + $0x80] sm:$0xff] %vm2344, %v2328
      %2362 = vst.msk [vmem:[%s221 + $0x88] sm:$0xff] %vm2344, %v2329
      %2363 = vst.msk [vmem:[%s221 + $0x90] sm:$0xff] %vm2344, %v2330
      %2364 = vst.msk [vmem:[%s221 + $0x98] sm:$0xff] %vm2344, %v2331
      %2365 = vst.msk [vmem:[%s221 + $0xa0] sm:$0xff] %vm2344, %v2332
      %2366 = vst.msk [vmem:[%s221 + $0xa8] sm:$0xff] %vm2344, %v2333
      %2367 = vst.msk [vmem:[%s221 + $0xb0] sm:$0xff] %vm2344, %v2334
      %2368 = vst.msk [vmem:[%s221 + $0xb8] sm:$0xff] %vm2344, %v2335
      %2369 = vst.msk [vmem:[%s221 + $0xc0] sm:$0xff] %vm2344, %v2336
      %2370 = vst.msk [vmem:[%s221 + $0xc8] sm:$0xff] %vm2344, %v2337
      %2371 = vst.msk [vmem:[%s221 + $0xd0] sm:$0xff] %vm2344, %v2338
      %2372 = vst.msk [vmem:[%s221 + $0xd8] sm:$0xff] %vm2344, %v2339
      %2373 = vst.msk [vmem:[%s221 + $0xe0] sm:$0xff] %vm2344, %v2340
      %2374 = vst.msk [vmem:[%s221 + $0xe8] sm:$0xff] %vm2344, %v2341
      %2375 = vst.msk [vmem:[%s221 + $0xf0] sm:$0xff] %vm2344, %v2342
      %2376 = vst.msk [vmem:[%s221 + $0xf8] sm:$0xff] %vm2344, %v2343
      %p2377 = scmp.lt.s32.totalorder %s18, 1
      %s2378 = scalar_select %p2377, %s18, 1
      %p2379 = scmp.lt.s32.totalorder %s19, 0
      %s2380 = scalar_select %p2379, %s19, 0
      %s2381 = smul.addr %s2378, 32
      %s2382 = sadd.s32 %s2380, %s2381
      %s2383 = smul.addr %s2382, 8
      %s2384 = scalar_lea.vmem %s3, %s2383
      // Predicated region
      $region37: #{tpu_custom_call.1} parent=31 // pred_check
        %p2385 = pneg %p124
      $region38: #{tpu_custom_call.1} parent=31 // pred_check_branch
        %2387 = sbr.rel (%p2385) target = $region40
      $region39: #{tpu_custom_call.1} parent=31 // pred_region
        _
      $region40: #{tpu_custom_call.1} parent=31 // pred_fallthru
        _
    $region32: #{tpu_custom_call.1} parent=5 // pred_fallthru
      _
    %p2388 = scmp.le.s32.totalorder 2, %s9
    // Predicated region
    $region41: #{tpu_custom_call.1} parent=5 // pred_check
      %p2389 = pneg %p2388
    $region42: #{tpu_custom_call.1} parent=5 // pred_check_branch
      %2391 = sbr.rel (%p2389) target = $region44
    $region43: #{tpu_custom_call.1} parent=5 // pred_region
      %s2392 = ssub.s32 %s9, 2
      // Predicated region
      $region45: #{tpu_custom_call.1} parent=43 // pred_check
        %p2393 = pneg %p130
      $region46: #{tpu_custom_call.1} parent=43 // pred_check_branch
        %2395 = sbr.rel (%p2393) target = $region48
      $region47: #{tpu_custom_call.1} parent=43 // pred_region
        %p2396 = scmp.lt.s32.totalorder %s20, 1
        %s2397 = scalar_select %p2396, %s20, 1
        %p2398 = scmp.lt.s32.totalorder %s21, 0
        %s2399 = scalar_select %p2398, %s21, 0
        %s2400 = smul.addr %s2397, 32
        %s2401 = sadd.s32 %s2399, %s2400
        %s2402 = smul.addr %s2401, 8
        %s2403 = scalar_lea.vmem %s3, %s2402
      $region48: #{tpu_custom_call.1} parent=43 // pred_fallthru
        _
    $region44: #{tpu_custom_call.1} parent=5 // pred_fallthru
      _
  $region6: #{tpu_custom_call.1} parent=0 // loop_footer
    %s13 = sadd.s32 1, %s9
  $region7: #{tpu_custom_call.1} parent=0 // loop_footer_branch
    %8 = sbr.rel target = $region3
  $region8: #{tpu_custom_call.1} parent=0 // loop_exit
    _

</llo_original>
